<compile_context>
chip_gen: v7x
topology: tpu7x:2x2x1
jax: 0.10.0
libtpu: 0.0.40
codegen_flags: <defaults>
</compile_context>

<pallas_src>
import functools

import jax
import jax.numpy as jnp
from jax import lax
from jax.experimental import pallas as pl
from jax.experimental.pallas import tpu as pltpu

_EPS = 1e-5


def _vmem_limit_bytes():
    # ~75% of the physical per-core VMEM (96 MiB on v5e/v6e, 48 MiB on v7x).
    try:
        return int(pltpu.get_tpu_info().vmem_capacity_bytes * 3 // 4)
    except Exception:
        return 48 * 1024 * 1024     # conservative fallback, safe on all gens


_VMEM_LIMIT = _vmem_limit_bytes()


# ----------------------------------------------------------------------------
# Kernel 1: fused attention gate, channel-major (per batch element, VMEM-res.)
#   h  = [Wg @ g ; Wx @ x1] + b        (one (2*f_int, S) activation)
#   hn = InstanceNorm(h)               (per channel, lane reduction over S)
#   p  = LeakyReLU(hn[:f_int] + hn[f_int:], 0.01)   (sublane-slice add)
#   a  = sigmoid(InstanceNorm(Wpsi @ p + bpsi))      -> (1, S) lane-dense
# ----------------------------------------------------------------------------
def _attn_gate_kernel(g_ref, x1_ref, wg_ref, wx_ref, b_ref, wpsi_ref,
                      bpsi_ref, a_ref):
    g = g_ref[0]                        # (f_g, S)
    x1 = x1_ref[0]                      # (f_l, S)

    # Merged [hg ; hx]: block-padded weights -> one wide activation so a
    # single InstanceNorm pass covers all 2*f_int channels.
    h = (jnp.dot(wg_ref[...], g, preferred_element_type=jnp.float32)
         + jnp.dot(wx_ref[...], x1, preferred_element_type=jnp.float32)
         + b_ref[...])                  # (2*f_int, S)

    # InstanceNorm per channel over the spatial (lane) axis.
    m = jnp.mean(h, axis=1, keepdims=True)
    hc = h - m
    v = jnp.mean(hc * hc, axis=1, keepdims=True)
    hn = hc * lax.rsqrt(v + _EPS)

    # p = IN(hg) + IN(hx): 8-aligned sublane-slice add (plain VPU op, no MXU).
    f_int = h.shape[0] // 2
    p = hn[:f_int] + hn[f_int:]
    p = jnp.where(p >= 0, p, 0.01 * p)                 # LeakyReLU(0.01)

    q = (jnp.dot(wpsi_ref[...], p, preferred_element_type=jnp.float32)
         + bpsi_ref[...])                              # (1, S)
    mq = jnp.mean(q, axis=1, keepdims=True)
    qc = q - mq
    vq = jnp.mean(qc * qc, axis=1, keepdims=True)
    a_ref[0] = jax.nn.sigmoid(qc * lax.rsqrt(vq + _EPS))   # lane-dense store


def attn_gate(g_cm, x1_cm, wg_wide, wx_wide, b_gx, wpsi, bpsi):
    N, f_g, S = g_cm.shape
    f_l = x1_cm.shape[1]
    f_int2 = wg_wide.shape[0]
    f_int = f_int2 // 2
    return pl.pallas_call(
        _attn_gate_kernel,
        out_shape=jax.ShapeDtypeStruct((N, 1, S), jnp.float32),
        grid_spec=pltpu.PrefetchScalarGridSpec(
            num_scalar_prefetch=0,
            grid=(N,),
            in_specs=[
                pl.BlockSpec((1, f_g, S), lambda n: (n, 0, 0)),
                pl.BlockSpec((1, f_l, S), lambda n: (n, 0, 0)),
                pl.BlockSpec((f_int2, f_g), lambda n: (0, 0)),
                pl.BlockSpec((f_int2, f_l), lambda n: (0, 0)),
                pl.BlockSpec((f_int2, 1), lambda n: (0, 0)),
                pl.BlockSpec((1, f_int), lambda n: (0, 0)),
                pl.BlockSpec((1, 1), lambda n: (0, 0)),
            ],
            out_specs=pl.BlockSpec((1, 1, S), lambda n: (n, 0, 0)),
        ),
        compiler_params=pltpu.CompilerParams(
            dimension_semantics=("parallel",),
            vmem_limit_bytes=_VMEM_LIMIT),
    )(g_cm, x1_cm, wg_wide, wx_wide, b_gx, wpsi, bpsi)


# ----------------------------------------------------------------------------
# Kernel 2: fused nearest-upsample(x2) * x, lane-dense.
#   x block      : (tb, 2, Ho, 2*W*f_l)   lane = (h-parity, W, channel)
#   gate block   : (tb, Ho, Wo)           coarse gate (same coarse-depth index)
#   gate lane expansion is a tiny 0/1 kron matmul on the idle MXU; the
#   full-resolution `a` map is written as a second lane-dense output.
# ----------------------------------------------------------------------------
def _upsample_mul_kernel(a_ref, x_ref, ek_ref, ekw_ref, o_ref, af_ref, *, tb):
    ek = ek_ref[...]                    # (Wo, 2*W*f_l) 0/1 expansion matrix
    ekw = ekw_ref[...]                  # (Wo, 2*W)     0/1 expansion matrix
    for t in range(tb):                 # tb coarse-depth slabs per grid step
        a = a_ref[t]                    # (Ho, Wo)
        a_lane = jnp.dot(a, ek, preferred_element_type=jnp.float32)   # (Ho, 2*W*f_l)
        o_ref[t, 0] = x_ref[t, 0] * a_lane
        o_ref[t, 1] = x_ref[t, 1] * a_lane
        a_w = jnp.dot(a, ekw, preferred_element_type=jnp.float32)     # (Ho, 2*W)
        af_ref[t, 0] = a_w
        af_ref[t, 1] = a_w


def _pick_tb(nd, slab_bytes, budget=4 << 20, max_tb=8):
    # Largest divisor of nd that keeps the per-step slab within ~budget.
    tb = max(1, min(max_tb, nd, budget // max(slab_bytes, 1)))
    while nd % tb:
        tb -= 1
    return tb


def upsample_mul(a_r, x_r, ek, ekw):
    ND, _, Ho, L = x_r.shape
    Wo = a_r.shape[-1]
    W2 = ekw.shape[-1]
    slab_bytes = 2 * 2 * Ho * L * 4            # x-in + out per coarse-depth slab
    tb = _pick_tb(ND, slab_bytes)
    kernel = functools.partial(_upsample_mul_kernel, tb=tb)
    return pl.pallas_call(
        kernel,
        out_shape=(jax.ShapeDtypeStruct((ND, 2, Ho, L), jnp.float32),
                   jax.ShapeDtypeStruct((ND, 2, Ho, W2), jnp.float32)),
        grid_spec=pltpu.PrefetchScalarGridSpec(
            num_scalar_prefetch=0,
            grid=(ND // tb,),
            in_specs=[
                pl.BlockSpec((tb, Ho, Wo), lambda b: (b, 0, 0)),
                pl.BlockSpec((tb, 2, Ho, L), lambda b: (b, 0, 0, 0)),
                pl.BlockSpec((Wo, L), lambda b: (0, 0)),
                pl.BlockSpec((Wo, W2), lambda b: (0, 0)),
            ],
            out_specs=(
                pl.BlockSpec((tb, 2, Ho, L), lambda b: (b, 0, 0, 0)),
                pl.BlockSpec((tb, 2, Ho, W2), lambda b: (b, 0, 0, 0)),
            ),
        ),
        compiler_params=pltpu.CompilerParams(
            dimension_semantics=("parallel",),
            vmem_limit_bytes=_VMEM_LIMIT),
    )(a_r, x_r, ek, ekw)


# ----------------------------------------------------------------------------
# Forward pass core (g channel-major, x channels-last; all reshapes are free)
# ----------------------------------------------------------------------------
def _forward_core(g_cm, x_cl, params):
    N, D, H, W, f_l = x_cl.shape
    assert D % 2 == 0 and H % 2 == 0 and W % 2 == 0, "spatial dims must be even"
    Do, Ho, Wo = D // 2, H // 2, W // 2
    S = Do * Ho * Wo
    assert g_cm.shape[0] == N and g_cm.shape[2] == S

    # d_conv delegated to XLA (channel counts too small to feed the MXU and
    # im2col would blow up HBM); output emitted channel-major for free.
    x1 = lax.conv_general_dilated(
        x_cl, params["w_d"], window_strides=(2, 2, 2),
        padding=((1, 1), (1, 1), (1, 1)),
        dimension_numbers=("NDHWC", "DHWIO", "NCDHW"))   # (N, f_l, Do, Ho, Wo)

    a_small = attn_gate(
        g_cm, x1.reshape(N, f_l, S),
        params["wg_wide"], params["wx_wide"], params["b_gx"],
        params["wpsi"], params["bpsi"])                  # (N, 1, S)

    # Kron lane-expansion matrices: coarse-w -> (h-parity, w, channel) lanes.
    L = 2 * W * f_l
    lane_wo = (jnp.arange(L, dtype=jnp.int32) // (2 * f_l)) % Wo
    ek = (lane_wo[None, :] ==
          jnp.arange(Wo, dtype=jnp.int32)[:, None]).astype(jnp.float32)
    lane_wo2 = (jnp.arange(2 * W, dtype=jnp.int32) // 2) % Wo
    ekw = (lane_wo2[None, :] ==
           jnp.arange(Wo, dtype=jnp.int32)[:, None]).astype(jnp.float32)

    # Free, contiguous reshapes only.
    x_r = x_cl.reshape(N * Do, 2, Ho, L)
    a_r = a_small.reshape(N * Do, Ho, Wo)
    out_r, a_full_r = upsample_mul(a_r, x_r, ek, ekw)

    out_cl = out_r.reshape(N, D, H, W, f_l)
    a_full = a_full_r.reshape(N, D, H, W)[:, None]       # (N, 1, D, H, W)
    return out_cl, a_full


# NCDHW boundary matching the PyTorch module: x gets one transpose in / one
# out; g is consumed channel-major directly (free reshape, no transpose).
def attention_block_forward(g, x, params):
    N, f_g = g.shape[0], g.shape[1]
    x_cl = jnp.transpose(x, (0, 2, 3, 4, 1))
    g_cm = g.reshape(N, f_g, -1)
    out_cl, a_full = _forward_core(g_cm, x_cl, params)
    return jnp.transpose(out_cl, (0, 4, 1, 2, 3)), a_full


# Channels-last entry for callers that already hold NDHWC data (no x
# transposes; g is tiny so its transpose is negligible).
def attention_block_forward_ndhwc(g_cl, x_cl, params):
    N, Do, Ho, Wo, f_g = g_cl.shape
    g_cm = jnp.transpose(g_cl, (0, 4, 1, 2, 3)).reshape(N, f_g, Do * Ho * Wo)
    return _forward_core(g_cm, x_cl, params)


# ----------------------------------------------------------------------------
# Parameter preparation from PyTorch-layout weights (done once).
# ----------------------------------------------------------------------------
def prepare_params(w_d, wg_c, bg, wx_c, bx, wpsi_c, bpsi):
    f_int, f_g = wg_c.shape[0], wg_c.shape[1]
    f_l = wx_c.shape[1]
    wg = wg_c[:, :, 0, 0, 0]                       # (f_int, f_g)
    wx = wx_c[:, :, 0, 0, 0]                       # (f_int, f_l)
    zg = jnp.zeros((f_int, f_g), jnp.float32)
    zx = jnp.zeros((f_int, f_l), jnp.float32)
    return dict(
        # (O, I, kd, kh, kw) -> (kd, kh, kw, I, O) for the NDHWC-input conv
        w_d=jnp.transpose(w_d, (2, 3, 4, 1, 0)),
        # block-padded so  wg_wide @ g + wx_wide @ x1 + b_gx = [hg ; hx]
        wg_wide=jnp.concatenate([wg, zg], axis=0),          # (2*f_int, f_g)
        wx_wide=jnp.concatenate([zx, wx], axis=0),          # (2*f_int, f_l)
        b_gx=jnp.concatenate([bg, bx]).reshape(2 * f_int, 1),
        wpsi=wpsi_c[:, :, 0, 0, 0],                         # (1, f_int)
        bpsi=bpsi.reshape(1, 1),
    )


# ----------------------------------------------------------------------------
# Pure-JAX reference (PyTorch semantics) for verification
# ----------------------------------------------------------------------------
def reference_forward(g, x, raw):
    w_d, wg_c, bg, wx_c, bx, wpsi_c, bpsi = raw

    def conv1x1(h, w, b):
        return (jnp.einsum("ncdhw,oc->nodhw", h, w[:, :, 0, 0, 0])
                + b[None, :, None, None, None])

    def inorm(h):
        m = h.mean(axis=(2, 3, 4), keepdims=True)
        v = ((h - m) ** 2).mean(axis=(2, 3, 4), keepdims=True)
        return (h - m) / jnp.sqrt(v + 1e-5)

    x1 = lax.conv_general_dilated(
        x, w_d, window_strides=(2, 2, 2), padding=((1, 1), (1, 1), (1, 1)),
        dimension_numbers=("NCDHW", "OIDHW", "NCDHW"))
    hx = inorm(conv1x1(x1, wx_c, bx))
    hg = inorm(conv1x1(g, wg_c, bg))
    p = hg + hx
    p = jnp.where(p >= 0, p, 0.01 * p)
    q = jax.nn.sigmoid(inorm(conv1x1(p, wpsi_c, bpsi)))
    a = jnp.repeat(jnp.repeat(jnp.repeat(q, 2, axis=2), 2, axis=3), 2, axis=4)
    return x * a, a


# ----------------------------------------------------------------------------
if __name__ == "__main__":
    N, f_l, f_g, f_int = 2, 4, 6, 8
    D = H = W = 8                       # x spatial; g spatial is D//2

    key = jax.random.PRNGKey(0)
    keys = jax.random.split(key, 9)
    x = jax.random.normal(keys[0], (N, f_l, D, H, W), jnp.float32)
    g = jax.random.normal(keys[1], (N, f_g, D // 2, H // 2, W // 2), jnp.float32)

    # deterministic parameters in PyTorch weight layouts
    w_d = 0.1 * jax.random.normal(keys[2], (f_l, f_l, 3, 3, 3), jnp.float32)
    wg_c = 0.2 * jax.random.normal(keys[3], (f_int, f_g, 1, 1, 1), jnp.float32)
    bg = 0.1 * jax.random.normal(keys[4], (f_int,), jnp.float32)
    wx_c = 0.2 * jax.random.normal(keys[5], (f_int, f_l, 1, 1, 1), jnp.float32)
    bx = 0.1 * jax.random.normal(keys[6], (f_int,), jnp.float32)
    wpsi_c = 0.2 * jax.random.normal(keys[7], (1, f_int, 1, 1, 1), jnp.float32)
    bpsi = 0.1 * jax.random.normal(keys[8], (1,), jnp.float32)

    params = prepare_params(w_d, wg_c, bg, wx_c, bx, wpsi_c, bpsi)

    out, a = jax.jit(attention_block_forward)(g, x, params)
    out, a = jax.block_until_ready((out, a))

    ref_out, ref_a = reference_forward(g, x, (w_d, wg_c, bg, wx_c, bx, wpsi_c, bpsi))
    assert out.shape == (N, f_l, D, H, W) and a.shape == (N, 1, D, H, W)
    assert jnp.allclose(out, ref_out, atol=1e-3, rtol=1e-3)
    assert jnp.allclose(a, ref_a, atol=1e-3, rtol=1e-3)

    print("KERNEL_OK")
</pallas_src>

<mosaic_0001>
module attributes {stable_mosaic.version = 11 : i64} {
  func.func @_attn_gate_kernel(%arg0: i32, %arg1: memref<1x6x64xf32, #tpu.memory_space<vmem>>, %arg2: memref<1x4x64xf32, #tpu.memory_space<vmem>>, %arg3: memref<16x6xf32, #tpu.memory_space<vmem>>, %arg4: memref<16x4xf32, #tpu.memory_space<vmem>>, %arg5: memref<16x1xf32, #tpu.memory_space<vmem>>, %arg6: memref<1x8xf32, #tpu.memory_space<vmem>>, %arg7: memref<1x1xf32, #tpu.memory_space<vmem>>, %arg8: memref<1x1x64xf32, #tpu.memory_space<vmem>>) attributes {dimension_semantics = [#tpu.dimension_semantics<parallel>], iteration_bounds = array<i64: 2>, scalar_prefetch = 0 : i64, scratch_operands = 0 : i64, tpu.core_type = #tpu.core_type<tc>, window_params = [{transform_indices = @transform_0, window_bounds = array<i64: 1, 6, 64>}, {transform_indices = @transform_1, window_bounds = array<i64: 1, 4, 64>}, {pipeline_mode = #tpu.pipeline_mode<synchronous>, transform_indices = @transform_2, window_bounds = array<i64: 16, 6>}, {pipeline_mode = #tpu.pipeline_mode<synchronous>, transform_indices = @transform_3, window_bounds = array<i64: 16, 4>}, {pipeline_mode = #tpu.pipeline_mode<synchronous>, transform_indices = @transform_4, window_bounds = array<i64: 16, 1>}, {pipeline_mode = #tpu.pipeline_mode<synchronous>, transform_indices = @transform_5, window_bounds = array<i64: 1, 8>}, {pipeline_mode = #tpu.pipeline_mode<synchronous>, transform_indices = @transform_6, window_bounds = array<i64: 1, 1>}, {transform_indices = @transform_7, window_bounds = array<i64: 1, 1, 64>}]} {
    %c0 = arith.constant 0 : index
    %c0_0 = arith.constant 0 : index
    %c0_1 = arith.constant 0 : index
    %0 = vector.load %arg1[%c0, %c0_0, %c0_1] : memref<1x6x64xf32, #tpu.memory_space<vmem>>, vector<1x6x64xf32>
    %1 = vector.shape_cast %0 : vector<1x6x64xf32> to vector<6x64xf32>
    %c0_2 = arith.constant 0 : index
    %c0_3 = arith.constant 0 : index
    %c0_4 = arith.constant 0 : index
    %2 = vector.load %arg2[%c0_2, %c0_3, %c0_4] : memref<1x4x64xf32, #tpu.memory_space<vmem>>, vector<1x4x64xf32>
    %3 = vector.shape_cast %2 : vector<1x4x64xf32> to vector<4x64xf32>
    %c0_5 = arith.constant 0 : index
    %c0_6 = arith.constant 0 : index
    %4 = vector.load %arg3[%c0_5, %c0_6] : memref<16x6xf32, #tpu.memory_space<vmem>>, vector<16x6xf32>
    %cst = arith.constant dense<0.000000e+00> : vector<16x64xf32>
    %5 = tpu.matmul %4, %1, %cst {dimension_numbers = #tpu.dot_dimension_numbers<[1], [0], [0], [1], [0, 0, 1, 1], [], []>} : vector<16x6xf32>, vector<6x64xf32>, vector<16x64xf32> -> vector<16x64xf32>
    %c0_7 = arith.constant 0 : index
    %c0_8 = arith.constant 0 : index
    %6 = vector.load %arg4[%c0_7, %c0_8] : memref<16x4xf32, #tpu.memory_space<vmem>>, vector<16x4xf32>
    %cst_9 = arith.constant dense<0.000000e+00> : vector<16x64xf32>
    %7 = tpu.matmul %6, %3, %cst_9 {dimension_numbers = #tpu.dot_dimension_numbers<[1], [0], [0], [1], [0, 0, 1, 1], [], []>} : vector<16x4xf32>, vector<4x64xf32>, vector<16x64xf32> -> vector<16x64xf32>
    %8 = arith.addf %5, %7 : vector<16x64xf32>
    %c0_10 = arith.constant 0 : index
    %c0_11 = arith.constant 0 : index
    %9 = vector.load %arg5[%c0_10, %c0_11] : memref<16x1xf32, #tpu.memory_space<vmem>>, vector<16x1xf32>
    %10 = vector.broadcast %9 : vector<16x1xf32> to vector<16x64xf32>
    %11 = arith.addf %8, %10 : vector<16x64xf32>
    %cst_12 = arith.constant dense<0.000000e+00> : vector<16xf32>
    %12 = vector.multi_reduction <add>, %11, %cst_12 [1] : vector<16x64xf32> to vector<16xf32>
    %13 = vector.shape_cast %12 : vector<16xf32> to vector<16x1xf32>
    %cst_13 = arith.constant 6.400000e+01 : f32
    %14 = vector.broadcast %cst_13 : f32 to vector<16x1xf32>
    %15 = arith.divf %13, %14 : vector<16x1xf32>
    %16 = vector.broadcast %15 : vector<16x1xf32> to vector<16x64xf32>
    %17 = arith.subf %11, %16 : vector<16x64xf32>
    %18 = arith.mulf %17, %17 : vector<16x64xf32>
    %cst_14 = arith.constant dense<0.000000e+00> : vector<16xf32>
    %19 = vector.multi_reduction <add>, %18, %cst_14 [1] : vector<16x64xf32> to vector<16xf32>
    %20 = vector.shape_cast %19 : vector<16xf32> to vector<16x1xf32>
    %cst_15 = arith.constant 6.400000e+01 : f32
    %21 = vector.broadcast %cst_15 : f32 to vector<16x1xf32>
    %22 = arith.divf %20, %21 : vector<16x1xf32>
    %cst_16 = arith.constant 9.99999974E-6 : f32
    %23 = vector.broadcast %cst_16 : f32 to vector<16x1xf32>
    %24 = arith.addf %22, %23 : vector<16x1xf32>
    %25 = math.rsqrt %24 : vector<16x1xf32>
    %26 = vector.broadcast %25 : vector<16x1xf32> to vector<16x64xf32>
    %27 = arith.mulf %17, %26 : vector<16x64xf32>
    %28 = vector.extract_strided_slice %27 {offsets = [0, 0], sizes = [8, 64], strides = [1, 1]} : vector<16x64xf32> to vector<8x64xf32>
    %29 = vector.extract_strided_slice %27 {offsets = [8, 0], sizes = [8, 64], strides = [1, 1]} : vector<16x64xf32> to vector<8x64xf32>
    %30 = arith.addf %28, %29 : vector<8x64xf32>
    %cst_17 = arith.constant 0.000000e+00 : f32
    %31 = vector.broadcast %cst_17 : f32 to vector<8x64xf32>
    %32 = arith.cmpf oge, %30, %31 : vector<8x64xf32>
    %cst_18 = arith.constant 0.00999999977 : f32
    %33 = vector.broadcast %cst_18 : f32 to vector<8x64xf32>
    %34 = arith.mulf %33, %30 : vector<8x64xf32>
    %35 = arith.select %32, %30, %34 : vector<8x64xi1>, vector<8x64xf32>
    %c0_19 = arith.constant 0 : index
    %c0_20 = arith.constant 0 : index
    %36 = vector.load %arg6[%c0_19, %c0_20] : memref<1x8xf32, #tpu.memory_space<vmem>>, vector<1x8xf32>
    %cst_21 = arith.constant dense<0.000000e+00> : vector<1x64xf32>
    %37 = tpu.matmul %36, %35, %cst_21 {dimension_numbers = #tpu.dot_dimension_numbers<[1], [0], [0], [1], [0, 0, 1, 1], [], []>} : vector<1x8xf32>, vector<8x64xf32>, vector<1x64xf32> -> vector<1x64xf32>
    %c0_22 = arith.constant 0 : index
    %c0_23 = arith.constant 0 : index
    %38 = vector.load %arg7[%c0_22, %c0_23] : memref<1x1xf32, #tpu.memory_space<vmem>>, vector<1x1xf32>
    %39 = vector.broadcast %38 : vector<1x1xf32> to vector<1x64xf32>
    %40 = arith.addf %37, %39 : vector<1x64xf32>
    %cst_24 = arith.constant dense<0.000000e+00> : vector<1xf32>
    %41 = vector.multi_reduction <add>, %40, %cst_24 [1] : vector<1x64xf32> to vector<1xf32>
    %42 = vector.shape_cast %41 : vector<1xf32> to vector<1x1xf32>
    %cst_25 = arith.constant 6.400000e+01 : f32
    %43 = vector.broadcast %cst_25 : f32 to vector<1x1xf32>
    %44 = arith.divf %42, %43 : vector<1x1xf32>
    %45 = vector.broadcast %44 : vector<1x1xf32> to vector<1x64xf32>
    %46 = arith.subf %40, %45 : vector<1x64xf32>
    %47 = arith.mulf %46, %46 : vector<1x64xf32>
    %cst_26 = arith.constant dense<0.000000e+00> : vector<1xf32>
    %48 = vector.multi_reduction <add>, %47, %cst_26 [1] : vector<1x64xf32> to vector<1xf32>
    %49 = vector.shape_cast %48 : vector<1xf32> to vector<1x1xf32>
    %cst_27 = arith.constant 6.400000e+01 : f32
    %50 = vector.broadcast %cst_27 : f32 to vector<1x1xf32>
    %51 = arith.divf %49, %50 : vector<1x1xf32>
    %cst_28 = arith.constant 9.99999974E-6 : f32
    %52 = vector.broadcast %cst_28 : f32 to vector<1x1xf32>
    %53 = arith.addf %51, %52 : vector<1x1xf32>
    %54 = math.rsqrt %53 : vector<1x1xf32>
    %55 = vector.broadcast %54 : vector<1x1xf32> to vector<1x64xf32>
    %56 = arith.mulf %46, %55 : vector<1x64xf32>
    %57 = arith.negf %56 : vector<1x64xf32>
    %58 = math.exp %57 : vector<1x64xf32>
    %cst_29 = arith.constant 1.000000e+00 : f32
    %59 = vector.broadcast %cst_29 : f32 to vector<1x64xf32>
    %60 = arith.addf %59, %58 : vector<1x64xf32>
    %61 = arith.divf %59, %60 : vector<1x64xf32>
    %c0_30 = arith.constant 0 : index
    %c0_31 = arith.constant 0 : index
    %c0_32 = arith.constant 0 : index
    %62 = vector.load %arg8[%c0_30, %c0_31, %c0_32] : memref<1x1x64xf32, #tpu.memory_space<vmem>>, vector<1x1x64xf32>
    %63 = vector.shape_cast %62 : vector<1x1x64xf32> to vector<1x64xf32>
    %64 = vector.shape_cast %61 : vector<1x64xf32> to vector<1x1x64xf32>
    tpu.vector_store %arg8[%c0_30, %c0_31, %c0_32], %64 {strides = array<i32>} : memref<1x1x64xf32, #tpu.memory_space<vmem>>, vector<1x1x64xf32>,
    return
  }
  func.func @transform_0(%arg0: i32) -> (i32, i32, i32) {
    %c0_i32 = arith.constant 0 : i32
    %c0_i32_0 = arith.constant 0 : i32
    %c0_i32_1 = arith.constant 0 : i32
    return %arg0, %c0_i32, %c0_i32_0 : i32, i32, i32
  }
  func.func @transform_1(%arg0: i32) -> (i32, i32, i32) {
    %c0_i32 = arith.constant 0 : i32
    %c0_i32_0 = arith.constant 0 : i32
    %c0_i32_1 = arith.constant 0 : i32
    return %arg0, %c0_i32, %c0_i32_0 : i32, i32, i32
  }
  func.func @transform_2(%arg0: i32) -> (i32, i32) {
    %c0_i32 = arith.constant 0 : i32
    %c0_i32_0 = arith.constant 0 : i32
    %c0_i32_1 = arith.constant 0 : i32
    return %c0_i32, %c0_i32_0 : i32, i32
  }
  func.func @transform_3(%arg0: i32) -> (i32, i32) {
    %c0_i32 = arith.constant 0 : i32
    %c0_i32_0 = arith.constant 0 : i32
    %c0_i32_1 = arith.constant 0 : i32
    return %c0_i32, %c0_i32_0 : i32, i32
  }
  func.func @transform_4(%arg0: i32) -> (i32, i32) {
    %c0_i32 = arith.constant 0 : i32
    %c0_i32_0 = arith.constant 0 : i32
    %c0_i32_1 = arith.constant 0 : i32
    return %c0_i32, %c0_i32_0 : i32, i32
  }
  func.func @transform_5(%arg0: i32) -> (i32, i32) {
    %c0_i32 = arith.constant 0 : i32
    %c0_i32_0 = arith.constant 0 : i32
    %c0_i32_1 = arith.constant 0 : i32
    return %c0_i32, %c0_i32_0 : i32, i32
  }
  func.func @transform_6(%arg0: i32) -> (i32, i32) {
    %c0_i32 = arith.constant 0 : i32
    %c0_i32_0 = arith.constant 0 : i32
    %c0_i32_1 = arith.constant 0 : i32
    return %c0_i32, %c0_i32_0 : i32, i32
  }
  func.func @transform_7(%arg0: i32) -> (i32, i32, i32) {
    %c0_i32 = arith.constant 0 : i32
    %c0_i32_0 = arith.constant 0 : i32
    %c0_i32_1 = arith.constant 0 : i32
    return %arg0, %c0_i32, %c0_i32_0 : i32, i32, i32
  }
}

module attributes {stable_mosaic.version = 11 : i64} {
  func.func @_upsample_mul_kernel(%arg0: i32, %arg1: memref<8x4x4xf32, #tpu.memory_space<vmem>>, %arg2: memref<8x2x4x64xf32, #tpu.memory_space<vmem>>, %arg3: memref<4x64xf32, #tpu.memory_space<vmem>>, %arg4: memref<4x16xf32, #tpu.memory_space<vmem>>, %arg5: memref<8x2x4x64xf32, #tpu.memory_space<vmem>>, %arg6: memref<8x2x4x16xf32, #tpu.memory_space<vmem>>) attributes {dimension_semantics = [#tpu.dimension_semantics<parallel>], iteration_bounds = array<i64: 1>, scalar_prefetch = 0 : i64, scratch_operands = 0 : i64, tpu.core_type = #tpu.core_type<tc>, window_params = [{transform_indices = @transform_0, window_bounds = array<i64: 8, 4, 4>}, {transform_indices = @transform_1, window_bounds = array<i64: 8, 2, 4, 64>}, {pipeline_mode = #tpu.pipeline_mode<synchronous>, transform_indices = @transform_2, window_bounds = array<i64: 4, 64>}, {pipeline_mode = #tpu.pipeline_mode<synchronous>, transform_indices = @transform_3, window_bounds = array<i64: 4, 16>}, {transform_indices = @transform_4, window_bounds = array<i64: 8, 2, 4, 64>}, {transform_indices = @transform_5, window_bounds = array<i64: 8, 2, 4, 16>}]} {
    %c0 = arith.constant 0 : index
    %c0_0 = arith.constant 0 : index
    %0 = vector.load %arg3[%c0, %c0_0] : memref<4x64xf32, #tpu.memory_space<vmem>>, vector<4x64xf32>
    %c0_1 = arith.constant 0 : index
    %c0_2 = arith.constant 0 : index
    %1 = vector.load %arg4[%c0_1, %c0_2] : memref<4x16xf32, #tpu.memory_space<vmem>>, vector<4x16xf32>
    %c0_3 = arith.constant 0 : index
    %c0_4 = arith.constant 0 : index
    %c0_5 = arith.constant 0 : index
    %2 = vector.load %arg1[%c0_3, %c0_4, %c0_5] : memref<8x4x4xf32, #tpu.memory_space<vmem>>, vector<1x4x4xf32>
    %3 = vector.shape_cast %2 : vector<1x4x4xf32> to vector<4x4xf32>
    %cst = arith.constant dense<0.000000e+00> : vector<4x64xf32>
    %4 = tpu.matmul %3, %0, %cst {dimension_numbers = #tpu.dot_dimension_numbers<[1], [0], [0], [1], [0, 0, 1, 1], [], []>} : vector<4x4xf32>, vector<4x64xf32>, vector<4x64xf32> -> vector<4x64xf32>
    %c0_6 = arith.constant 0 : index
    %c0_7 = arith.constant 0 : index
    %c0_8 = arith.constant 0 : index
    %c0_9 = arith.constant 0 : index
    %5 = vector.load %arg2[%c0_6, %c0_7, %c0_8, %c0_9] : memref<8x2x4x64xf32, #tpu.memory_space<vmem>>, vector<1x1x4x64xf32>
    %6 = vector.shape_cast %5 : vector<1x1x4x64xf32> to vector<4x64xf32>
    %7 = arith.mulf %6, %4 : vector<4x64xf32>
    %c0_10 = arith.constant 0 : index
    %c0_11 = arith.constant 0 : index
    %c0_12 = arith.constant 0 : index
    %c0_13 = arith.constant 0 : index
    %8 = vector.load %arg5[%c0_10, %c0_11, %c0_12, %c0_13] : memref<8x2x4x64xf32, #tpu.memory_space<vmem>>, vector<1x1x4x64xf32>
    %9 = vector.shape_cast %8 : vector<1x1x4x64xf32> to vector<4x64xf32>
    %10 = vector.shape_cast %7 : vector<4x64xf32> to vector<1x1x4x64xf32>
    tpu.vector_store %arg5[%c0_10, %c0_11, %c0_12, %c0_13], %10 {strides = array<i32>} : memref<8x2x4x64xf32, #tpu.memory_space<vmem>>, vector<1x1x4x64xf32>,
    %c0_14 = arith.constant 0 : index
    %c1 = arith.constant 1 : index
    %c0_15 = arith.constant 0 : index
    %c0_16 = arith.constant 0 : index
    %11 = vector.load %arg2[%c0_14, %c1, %c0_15, %c0_16] : memref<8x2x4x64xf32, #tpu.memory_space<vmem>>, vector<1x1x4x64xf32>
    %12 = vector.shape_cast %11 : vector<1x1x4x64xf32> to vector<4x64xf32>
    %13 = arith.mulf %12, %4 : vector<4x64xf32>
    %c0_17 = arith.constant 0 : index
    %c1_18 = arith.constant 1 : index
    %c0_19 = arith.constant 0 : index
    %c0_20 = arith.constant 0 : index
    %14 = vector.load %arg5[%c0_17, %c1_18, %c0_19, %c0_20] : memref<8x2x4x64xf32, #tpu.memory_space<vmem>>, vector<1x1x4x64xf32>
    %15 = vector.shape_cast %14 : vector<1x1x4x64xf32> to vector<4x64xf32>
    %16 = vector.shape_cast %13 : vector<4x64xf32> to vector<1x1x4x64xf32>
    tpu.vector_store %arg5[%c0_17, %c1_18, %c0_19, %c0_20], %16 {strides = array<i32>} : memref<8x2x4x64xf32, #tpu.memory_space<vmem>>, vector<1x1x4x64xf32>,
    %cst_21 = arith.constant dense<0.000000e+00> : vector<4x16xf32>
    %17 = tpu.matmul %3, %1, %cst_21 {dimension_numbers = #tpu.dot_dimension_numbers<[1], [0], [0], [1], [0, 0, 1, 1], [], []>} : vector<4x4xf32>, vector<4x16xf32>, vector<4x16xf32> -> vector<4x16xf32>
    %c0_22 = arith.constant 0 : index
    %c0_23 = arith.constant 0 : index
    %c0_24 = arith.constant 0 : index
    %c0_25 = arith.constant 0 : index
    %18 = vector.load %arg6[%c0_22, %c0_23, %c0_24, %c0_25] : memref<8x2x4x16xf32, #tpu.memory_space<vmem>>, vector<1x1x4x16xf32>
    %19 = vector.shape_cast %18 : vector<1x1x4x16xf32> to vector<4x16xf32>
    %20 = vector.shape_cast %17 : vector<4x16xf32> to vector<1x1x4x16xf32>
    tpu.vector_store %arg6[%c0_22, %c0_23, %c0_24, %c0_25], %20 {strides = array<i32>} : memref<8x2x4x16xf32, #tpu.memory_space<vmem>>, vector<1x1x4x16xf32>,
    %c0_26 = arith.constant 0 : index
    %c1_27 = arith.constant 1 : index
    %c0_28 = arith.constant 0 : index
    %c0_29 = arith.constant 0 : index
    %21 = vector.load %arg6[%c0_26, %c1_27, %c0_28, %c0_29] : memref<8x2x4x16xf32, #tpu.memory_space<vmem>>, vector<1x1x4x16xf32>
    %22 = vector.shape_cast %21 : vector<1x1x4x16xf32> to vector<4x16xf32>
    %23 = vector.shape_cast %17 : vector<4x16xf32> to vector<1x1x4x16xf32>
    tpu.vector_store %arg6[%c0_26, %c1_27, %c0_28, %c0_29], %23 {strides = array<i32>} : memref<8x2x4x16xf32, #tpu.memory_space<vmem>>, vector<1x1x4x16xf32>,
    %c1_30 = arith.constant 1 : index
    %c0_31 = arith.constant 0 : index
    %c0_32 = arith.constant 0 : index
    %24 = vector.load %arg1[%c1_30, %c0_31, %c0_32] : memref<8x4x4xf32, #tpu.memory_space<vmem>>, vector<1x4x4xf32>
    %25 = vector.shape_cast %24 : vector<1x4x4xf32> to vector<4x4xf32>
    %cst_33 = arith.constant dense<0.000000e+00> : vector<4x64xf32>
    %26 = tpu.matmul %25, %0, %cst_33 {dimension_numbers = #tpu.dot_dimension_numbers<[1], [0], [0], [1], [0, 0, 1, 1], [], []>} : vector<4x4xf32>, vector<4x64xf32>, vector<4x64xf32> -> vector<4x64xf32>
    %c1_34 = arith.constant 1 : index
    %c0_35 = arith.constant 0 : index
    %c0_36 = arith.constant 0 : index
    %c0_37 = arith.constant 0 : index
    %27 = vector.load %arg2[%c1_34, %c0_35, %c0_36, %c0_37] : memref<8x2x4x64xf32, #tpu.memory_space<vmem>>, vector<1x1x4x64xf32>
    %28 = vector.shape_cast %27 : vector<1x1x4x64xf32> to vector<4x64xf32>
    %29 = arith.mulf %28, %26 : vector<4x64xf32>
    %c1_38 = arith.constant 1 : index
    %c0_39 = arith.constant 0 : index
    %c0_40 = arith.constant 0 : index
    %c0_41 = arith.constant 0 : index
    %30 = vector.load %arg5[%c1_38, %c0_39, %c0_40, %c0_41] : memref<8x2x4x64xf32, #tpu.memory_space<vmem>>, vector<1x1x4x64xf32>
    %31 = vector.shape_cast %30 : vector<1x1x4x64xf32> to vector<4x64xf32>
    %32 = vector.shape_cast %29 : vector<4x64xf32> to vector<1x1x4x64xf32>
    tpu.vector_store %arg5[%c1_38, %c0_39, %c0_40, %c0_41], %32 {strides = array<i32>} : memref<8x2x4x64xf32, #tpu.memory_space<vmem>>, vector<1x1x4x64xf32>,
    %c1_42 = arith.constant 1 : index
    %c1_43 = arith.constant 1 : index
    %c0_44 = arith.constant 0 : index
    %c0_45 = arith.constant 0 : index
    %33 = vector.load %arg2[%c1_42, %c1_43, %c0_44, %c0_45] : memref<8x2x4x64xf32, #tpu.memory_space<vmem>>, vector<1x1x4x64xf32>
    %34 = vector.shape_cast %33 : vector<1x1x4x64xf32> to vector<4x64xf32>
    %35 = arith.mulf %34, %26 : vector<4x64xf32>
    %c1_46 = arith.constant 1 : index
    %c1_47 = arith.constant 1 : index
    %c0_48 = arith.constant 0 : index
    %c0_49 = arith.constant 0 : index
    %36 = vector.load %arg5[%c1_46, %c1_47, %c0_48, %c0_49] : memref<8x2x4x64xf32, #tpu.memory_space<vmem>>, vector<1x1x4x64xf32>
    %37 = vector.shape_cast %36 : vector<1x1x4x64xf32> to vector<4x64xf32>
    %38 = vector.shape_cast %35 : vector<4x64xf32> to vector<1x1x4x64xf32>
    tpu.vector_store %arg5[%c1_46, %c1_47, %c0_48, %c0_49], %38 {strides = array<i32>} : memref<8x2x4x64xf32, #tpu.memory_space<vmem>>, vector<1x1x4x64xf32>,
    %cst_50 = arith.constant dense<0.000000e+00> : vector<4x16xf32>
    %39 = tpu.matmul %25, %1, %cst_50 {dimension_numbers = #tpu.dot_dimension_numbers<[1], [0], [0], [1], [0, 0, 1, 1], [], []>} : vector<4x4xf32>, vector<4x16xf32>, vector<4x16xf32> -> vector<4x16xf32>
    %c1_51 = arith.constant 1 : index
    %c0_52 = arith.constant 0 : index
    %c0_53 = arith.constant 0 : index
    %c0_54 = arith.constant 0 : index
    %40 = vector.load %arg6[%c1_51, %c0_52, %c0_53, %c0_54] : memref<8x2x4x16xf32, #tpu.memory_space<vmem>>, vector<1x1x4x16xf32>
    %41 = vector.shape_cast %40 : vector<1x1x4x16xf32> to vector<4x16xf32>
    %42 = vector.shape_cast %39 : vector<4x16xf32> to vector<1x1x4x16xf32>
    tpu.vector_store %arg6[%c1_51, %c0_52, %c0_53, %c0_54], %42 {strides = array<i32>} : memref<8x2x4x16xf32, #tpu.memory_space<vmem>>, vector<1x1x4x16xf32>,
    %c1_55 = arith.constant 1 : index
    %c1_56 = arith.constant 1 : index
    %c0_57 = arith.constant 0 : index
    %c0_58 = arith.constant 0 : index
    %43 = vector.load %arg6[%c1_55, %c1_56, %c0_57, %c0_58] : memref<8x2x4x16xf32, #tpu.memory_space<vmem>>, vector<1x1x4x16xf32>
    %44 = vector.shape_cast %43 : vector<1x1x4x16xf32> to vector<4x16xf32>
    %45 = vector.shape_cast %39 : vector<4x16xf32> to vector<1x1x4x16xf32>
    tpu.vector_store %arg6[%c1_55, %c1_56, %c0_57, %c0_58], %45 {strides = array<i32>} : memref<8x2x4x16xf32, #tpu.memory_space<vmem>>, vector<1x1x4x16xf32>,
    %c2 = arith.constant 2 : index
    %c0_59 = arith.constant 0 : index
    %c0_60 = arith.constant 0 : index
    %46 = vector.load %arg1[%c2, %c0_59, %c0_60] : memref<8x4x4xf32, #tpu.memory_space<vmem>>, vector<1x4x4xf32>
    %47 = vector.shape_cast %46 : vector<1x4x4xf32> to vector<4x4xf32>
    %cst_61 = arith.constant dense<0.000000e+00> : vector<4x64xf32>
    %48 = tpu.matmul %47, %0, %cst_61 {dimension_numbers = #tpu.dot_dimension_numbers<[1], [0], [0], [1], [0, 0, 1, 1], [], []>} : vector<4x4xf32>, vector<4x64xf32>, vector<4x64xf32> -> vector<4x64xf32>
    %c2_62 = arith.constant 2 : index
    %c0_63 = arith.constant 0 : index
    %c0_64 = arith.constant 0 : index
    %c0_65 = arith.constant 0 : index
    %49 = vector.load %arg2[%c2_62, %c0_63, %c0_64, %c0_65] : memref<8x2x4x64xf32, #tpu.memory_space<vmem>>, vector<1x1x4x64xf32>
    %50 = vector.shape_cast %49 : vector<1x1x4x64xf32> to vector<4x64xf32>
    %51 = arith.mulf %50, %48 : vector<4x64xf32>
    %c2_66 = arith.constant 2 : index
    %c0_67 = arith.constant 0 : index
    %c0_68 = arith.constant 0 : index
    %c0_69 = arith.constant 0 : index
    %52 = vector.load %arg5[%c2_66, %c0_67, %c0_68, %c0_69] : memref<8x2x4x64xf32, #tpu.memory_space<vmem>>, vector<1x1x4x64xf32>
    %53 = vector.shape_cast %52 : vector<1x1x4x64xf32> to vector<4x64xf32>
    %54 = vector.shape_cast %51 : vector<4x64xf32> to vector<1x1x4x64xf32>
    tpu.vector_store %arg5[%c2_66, %c0_67, %c0_68, %c0_69], %54 {strides = array<i32>} : memref<8x2x4x64xf32, #tpu.memory_space<vmem>>, vector<1x1x4x64xf32>,
    %c2_70 = arith.constant 2 : index
    %c1_71 = arith.constant 1 : index
    %c0_72 = arith.constant 0 : index
    %c0_73 = arith.constant 0 : index
    %55 = vector.load %arg2[%c2_70, %c1_71, %c0_72, %c0_73] : memref<8x2x4x64xf32, #tpu.memory_space<vmem>>, vector<1x1x4x64xf32>
    %56 = vector.shape_cast %55 : vector<1x1x4x64xf32> to vector<4x64xf32>
    %57 = arith.mulf %56, %48 : vector<4x64xf32>
    %c2_74 = arith.constant 2 : index
    %c1_75 = arith.constant 1 : index
    %c0_76 = arith.constant 0 : index
    %c0_77 = arith.constant 0 : index
    %58 = vector.load %arg5[%c2_74, %c1_75, %c0_76, %c0_77] : memref<8x2x4x64xf32, #tpu.memory_space<vmem>>, vector<1x1x4x64xf32>
    %59 = vector.shape_cast %58 : vector<1x1x4x64xf32> to vector<4x64xf32>
    %60 = vector.shape_cast %57 : vector<4x64xf32> to vector<1x1x4x64xf32>
    tpu.vector_store %arg5[%c2_74, %c1_75, %c0_76, %c0_77], %60 {strides = array<i32>} : memref<8x2x4x64xf32, #tpu.memory_space<vmem>>, vector<1x1x4x64xf32>,
    %cst_78 = arith.constant dense<0.000000e+00> : vector<4x16xf32>
    %61 = tpu.matmul %47, %1, %cst_78 {dimension_numbers = #tpu.dot_dimension_numbers<[1], [0], [0], [1], [0, 0, 1, 1], [], []>} : vector<4x4xf32>, vector<4x16xf32>, vector<4x16xf32> -> vector<4x16xf32>
    %c2_79 = arith.constant 2 : index
    %c0_80 = arith.constant 0 : index
    %c0_81 = arith.constant 0 : index
    %c0_82 = arith.constant 0 : index
    %62 = vector.load %arg6[%c2_79, %c0_80, %c0_81, %c0_82] : memref<8x2x4x16xf32, #tpu.memory_space<vmem>>, vector<1x1x4x16xf32>
    %63 = vector.shape_cast %62 : vector<1x1x4x16xf32> to vector<4x16xf32>
    %64 = vector.shape_cast %61 : vector<4x16xf32> to vector<1x1x4x16xf32>
    tpu.vector_store %arg6[%c2_79, %c0_80, %c0_81, %c0_82], %64 {strides = array<i32>} : memref<8x2x4x16xf32, #tpu.memory_space<vmem>>, vector<1x1x4x16xf32>,
    %c2_83 = arith.constant 2 : index
    %c1_84 = arith.constant 1 : index
    %c0_85 = arith.constant 0 : index
    %c0_86 = arith.constant 0 : index
    %65 = vector.load %arg6[%c2_83, %c1_84, %c0_85, %c0_86] : memref<8x2x4x16xf32, #tpu.memory_space<vmem>>, vector<1x1x4x16xf32>
    %66 = vector.shape_cast %65 : vector<1x1x4x16xf32> to vector<4x16xf32>
    %67 = vector.shape_cast %61 : vector<4x16xf32> to vector<1x1x4x16xf32>
    tpu.vector_store %arg6[%c2_83, %c1_84, %c0_85, %c0_86], %67 {strides = array<i32>} : memref<8x2x4x16xf32, #tpu.memory_space<vmem>>, vector<1x1x4x16xf32>,
    %c3 = arith.constant 3 : index
    %c0_87 = arith.constant 0 : index
    %c0_88 = arith.constant 0 : index
    %68 = vector.load %arg1[%c3, %c0_87, %c0_88] : memref<8x4x4xf32, #tpu.memory_space<vmem>>, vector<1x4x4xf32>
    %69 = vector.shape_cast %68 : vector<1x4x4xf32> to vector<4x4xf32>
    %cst_89 = arith.constant dense<0.000000e+00> : vector<4x64xf32>
    %70 = tpu.matmul %69, %0, %cst_89 {dimension_numbers = #tpu.dot_dimension_numbers<[1], [0], [0], [1], [0, 0, 1, 1], [], []>} : vector<4x4xf32>, vector<4x64xf32>, vector<4x64xf32> -> vector<4x64xf32>
    %c3_90 = arith.constant 3 : index
    %c0_91 = arith.constant 0 : index
    %c0_92 = arith.constant 0 : index
    %c0_93 = arith.constant 0 : index
    %71 = vector.load %arg2[%c3_90, %c0_91, %c0_92, %c0_93] : memref<8x2x4x64xf32, #tpu.memory_space<vmem>>, vector<1x1x4x64xf32>
    %72 = vector.shape_cast %71 : vector<1x1x4x64xf32> to vector<4x64xf32>
    %73 = arith.mulf %72, %70 : vector<4x64xf32>
    %c3_94 = arith.constant 3 : index
    %c0_95 = arith.constant 0 : index
    %c0_96 = arith.constant 0 : index
    %c0_97 = arith.constant 0 : index
    %74 = vector.load %arg5[%c3_94, %c0_95, %c0_96, %c0_97] : memref<8x2x4x64xf32, #tpu.memory_space<vmem>>, vector<1x1x4x64xf32>
    %75 = vector.shape_cast %74 : vector<1x1x4x64xf32> to vector<4x64xf32>
    %76 = vector.shape_cast %73 : vector<4x64xf32> to vector<1x1x4x64xf32>
    tpu.vector_store %arg5[%c3_94, %c0_95, %c0_96, %c0_97], %76 {strides = array<i32>} : memref<8x2x4x64xf32, #tpu.memory_space<vmem>>, vector<1x1x4x64xf32>,
    %c3_98 = arith.constant 3 : index
    %c1_99 = arith.constant 1 : index
    %c0_100 = arith.constant 0 : index
    %c0_101 = arith.constant 0 : index
    %77 = vector.load %arg2[%c3_98, %c1_99, %c0_100, %c0_101] : memref<8x2x4x64xf32, #tpu.memory_space<vmem>>, vector<1x1x4x64xf32>
    %78 = vector.shape_cast %77 : vector<1x1x4x64xf32> to vector<4x64xf32>
    %79 = arith.mulf %78, %70 : vector<4x64xf32>
    %c3_102 = arith.constant 3 : index
    %c1_103 = arith.constant 1 : index
    %c0_104 = arith.constant 0 : index
    %c0_105 = arith.constant 0 : index
    %80 = vector.load %arg5[%c3_102, %c1_103, %c0_104, %c0_105] : memref<8x2x4x64xf32, #tpu.memory_space<vmem>>, vector<1x1x4x64xf32>
    %81 = vector.shape_cast %80 : vector<1x1x4x64xf32> to vector<4x64xf32>
    %82 = vector.shape_cast %79 : vector<4x64xf32> to vector<1x1x4x64xf32>
    tpu.vector_store %arg5[%c3_102, %c1_103, %c0_104, %c0_105], %82 {strides = array<i32>} : memref<8x2x4x64xf32, #tpu.memory_space<vmem>>, vector<1x1x4x64xf32>,
    %cst_106 = arith.constant dense<0.000000e+00> : vector<4x16xf32>
    %83 = tpu.matmul %69, %1, %cst_106 {dimension_numbers = #tpu.dot_dimension_numbers<[1], [0], [0], [1], [0, 0, 1, 1], [], []>} : vector<4x4xf32>, vector<4x16xf32>, vector<4x16xf32> -> vector<4x16xf32>
    %c3_107 = arith.constant 3 : index
    %c0_108 = arith.constant 0 : index
    %c0_109 = arith.constant 0 : index
    %c0_110 = arith.constant 0 : index
    %84 = vector.load %arg6[%c3_107, %c0_108, %c0_109, %c0_110] : memref<8x2x4x16xf32, #tpu.memory_space<vmem>>, vector<1x1x4x16xf32>
    %85 = vector.shape_cast %84 : vector<1x1x4x16xf32> to vector<4x16xf32>
    %86 = vector.shape_cast %83 : vector<4x16xf32> to vector<1x1x4x16xf32>
    tpu.vector_store %arg6[%c3_107, %c0_108, %c0_109, %c0_110], %86 {strides = array<i32>} : memref<8x2x4x16xf32, #tpu.memory_space<vmem>>, vector<1x1x4x16xf32>,
    %c3_111 = arith.constant 3 : index
    %c1_112 = arith.constant 1 : index
    %c0_113 = arith.constant 0 : index
    %c0_114 = arith.constant 0 : index
    %87 = vector.load %arg6[%c3_111, %c1_112, %c0_113, %c0_114] : memref<8x2x4x16xf32, #tpu.memory_space<vmem>>, vector<1x1x4x16xf32>
    %88 = vector.shape_cast %87 : vector<1x1x4x16xf32> to vector<4x16xf32>
    %89 = vector.shape_cast %83 : vector<4x16xf32> to vector<1x1x4x16xf32>
    tpu.vector_store %arg6[%c3_111, %c1_112, %c0_113, %c0_114], %89 {strides = array<i32>} : memref<8x2x4x16xf32, #tpu.memory_space<vmem>>, vector<1x1x4x16xf32>,
    %c4 = arith.constant 4 : index
    %c0_115 = arith.constant 0 : index
    %c0_116 = arith.constant 0 : index
    %90 = vector.load %arg1[%c4, %c0_115, %c0_116] : memref<8x4x4xf32, #tpu.memory_space<vmem>>, vector<1x4x4xf32>
    %91 = vector.shape_cast %90 : vector<1x4x4xf32> to vector<4x4xf32>
    %cst_117 = arith.constant dense<0.000000e+00> : vector<4x64xf32>
    %92 = tpu.matmul %91, %0, %cst_117 {dimension_numbers = #tpu.dot_dimension_numbers<[1], [0], [0], [1], [0, 0, 1, 1], [], []>} : vector<4x4xf32>, vector<4x64xf32>, vector<4x64xf32> -> vector<4x64xf32>
    %c4_118 = arith.constant 4 : index
    %c0_119 = arith.constant 0 : index
    %c0_120 = arith.constant 0 : index
    %c0_121 = arith.constant 0 : index
    %93 = vector.load %arg2[%c4_118, %c0_119, %c0_120, %c0_121] : memref<8x2x4x64xf32, #tpu.memory_space<vmem>>, vector<1x1x4x64xf32>
    %94 = vector.shape_cast %93 : vector<1x1x4x64xf32> to vector<4x64xf32>
    %95 = arith.mulf %94, %92 : vector<4x64xf32>
    %c4_122 = arith.constant 4 : index
    %c0_123 = arith.constant 0 : index
    %c0_124 = arith.constant 0 : index
    %c0_125 = arith.constant 0 : index
    %96 = vector.load %arg5[%c4_122, %c0_123, %c0_124, %c0_125] : memref<8x2x4x64xf32, #tpu.memory_space<vmem>>, vector<1x1x4x64xf32>
    %97 = vector.shape_cast %96 : vector<1x1x4x64xf32> to vector<4x64xf32>
    %98 = vector.shape_cast %95 : vector<4x64xf32> to vector<1x1x4x64xf32>
    tpu.vector_store %arg5[%c4_122, %c0_123, %c0_124, %c0_125], %98 {strides = array<i32>} : memref<8x2x4x64xf32, #tpu.memory_space<vmem>>, vector<1x1x4x64xf32>,
    %c4_126 = arith.constant 4 : index
    %c1_127 = arith.constant 1 : index
    %c0_128 = arith.constant 0 : index
    %c0_129 = arith.constant 0 : index
    %99 = vector.load %arg2[%c4_126, %c1_127, %c0_128, %c0_129] : memref<8x2x4x64xf32, #tpu.memory_space<vmem>>, vector<1x1x4x64xf32>
    %100 = vector.shape_cast %99 : vector<1x1x4x64xf32> to vector<4x64xf32>
    %101 = arith.mulf %100, %92 : vector<4x64xf32>
    %c4_130 = arith.constant 4 : index
    %c1_131 = arith.constant 1 : index
    %c0_132 = arith.constant 0 : index
    %c0_133 = arith.constant 0 : index
    %102 = vector.load %arg5[%c4_130, %c1_131, %c0_132, %c0_133] : memref<8x2x4x64xf32, #tpu.memory_space<vmem>>, vector<1x1x4x64xf32>
    %103 = vector.shape_cast %102 : vector<1x1x4x64xf32> to vector<4x64xf32>
    %104 = vector.shape_cast %101 : vector<4x64xf32> to vector<1x1x4x64xf32>
    tpu.vector_store %arg5[%c4_130, %c1_131, %c0_132, %c0_133], %104 {strides = array<i32>} : memref<8x2x4x64xf32, #tpu.memory_space<vmem>>, vector<1x1x4x64xf32>,
    %cst_134 = arith.constant dense<0.000000e+00> : vector<4x16xf32>
    %105 = tpu.matmul %91, %1, %cst_134 {dimension_numbers = #tpu.dot_dimension_numbers<[1], [0], [0], [1], [0, 0, 1, 1], [], []>} : vector<4x4xf32>, vector<4x16xf32>, vector<4x16xf32> -> vector<4x16xf32>
    %c4_135 = arith.constant 4 : index
    %c0_136 = arith.constant 0 : index
    %c0_137 = arith.constant 0 : index
    %c0_138 = arith.constant 0 : index
    %106 = vector.load %arg6[%c4_135, %c0_136, %c0_137, %c0_138] : memref<8x2x4x16xf32, #tpu.memory_space<vmem>>, vector<1x1x4x16xf32>
    %107 = vector.shape_cast %106 : vector<1x1x4x16xf32> to vector<4x16xf32>
    %108 = vector.shape_cast %105 : vector<4x16xf32> to vector<1x1x4x16xf32>
    tpu.vector_store %arg6[%c4_135, %c0_136, %c0_137, %c0_138], %108 {strides = array<i32>} : memref<8x2x4x16xf32, #tpu.memory_space<vmem>>, vector<1x1x4x16xf32>,
    %c4_139 = arith.constant 4 : index
    %c1_140 = arith.constant 1 : index
    %c0_141 = arith.constant 0 : index
    %c0_142 = arith.constant 0 : index
    %109 = vector.load %arg6[%c4_139, %c1_140, %c0_141, %c0_142] : memref<8x2x4x16xf32, #tpu.memory_space<vmem>>, vector<1x1x4x16xf32>
    %110 = vector.shape_cast %109 : vector<1x1x4x16xf32> to vector<4x16xf32>
    %111 = vector.shape_cast %105 : vector<4x16xf32> to vector<1x1x4x16xf32>
    tpu.vector_store %arg6[%c4_139, %c1_140, %c0_141, %c0_142], %111 {strides = array<i32>} : memref<8x2x4x16xf32, #tpu.memory_space<vmem>>, vector<1x1x4x16xf32>,
    %c5 = arith.constant 5 : index
    %c0_143 = arith.constant 0 : index
    %c0_144 = arith.constant 0 : index
    %112 = vector.load %arg1[%c5, %c0_143, %c0_144] : memref<8x4x4xf32, #tpu.memory_space<vmem>>, vector<1x4x4xf32>
    %113 = vector.shape_cast %112 : vector<1x4x4xf32> to vector<4x4xf32>
    %cst_145 = arith.constant dense<0.000000e+00> : vector<4x64xf32>
    %114 = tpu.matmul %113, %0, %cst_145 {dimension_numbers = #tpu.dot_dimension_numbers<[1], [0], [0], [1], [0, 0, 1, 1], [], []>} : vector<4x4xf32>, vector<4x64xf32>, vector<4x64xf32> -> vector<4x64xf32>
    %c5_146 = arith.constant 5 : index
    %c0_147 = arith.constant 0 : index
    %c0_148 = arith.constant 0 : index
    %c0_149 = arith.constant 0 : index
    %115 = vector.load %arg2[%c5_146, %c0_147, %c0_148, %c0_149] : memref<8x2x4x64xf32, #tpu.memory_space<vmem>>, vector<1x1x4x64xf32>
    %116 = vector.shape_cast %115 : vector<1x1x4x64xf32> to vector<4x64xf32>
    %117 = arith.mulf %116, %114 : vector<4x64xf32>
    %c5_150 = arith.constant 5 : index
    %c0_151 = arith.constant 0 : index
    %c0_152 = arith.constant 0 : index
    %c0_153 = arith.constant 0 : index
    %118 = vector.load %arg5[%c5_150, %c0_151, %c0_152, %c0_153] : memref<8x2x4x64xf32, #tpu.memory_space<vmem>>, vector<1x1x4x64xf32>
    %119 = vector.shape_cast %118 : vector<1x1x4x64xf32> to vector<4x64xf32>
    %120 = vector.shape_cast %117 : vector<4x64xf32> to vector<1x1x4x64xf32>
    tpu.vector_store %arg5[%c5_150, %c0_151, %c0_152, %c0_153], %120 {strides = array<i32>} : memref<8x2x4x64xf32, #tpu.memory_space<vmem>>, vector<1x1x4x64xf32>,
    %c5_154 = arith.constant 5 : index
    %c1_155 = arith.constant 1 : index
    %c0_156 = arith.constant 0 : index
    %c0_157 = arith.constant 0 : index
    %121 = vector.load %arg2[%c5_154, %c1_155, %c0_156, %c0_157] : memref<8x2x4x64xf32, #tpu.memory_space<vmem>>, vector<1x1x4x64xf32>
    %122 = vector.shape_cast %121 : vector<1x1x4x64xf32> to vector<4x64xf32>
    %123 = arith.mulf %122, %114 : vector<4x64xf32>
    %c5_158 = arith.constant 5 : index
    %c1_159 = arith.constant 1 : index
    %c0_160 = arith.constant 0 : index
    %c0_161 = arith.constant 0 : index
    %124 = vector.load %arg5[%c5_158, %c1_159, %c0_160, %c0_161] : memref<8x2x4x64xf32, #tpu.memory_space<vmem>>, vector<1x1x4x64xf32>
    %125 = vector.shape_cast %124 : vector<1x1x4x64xf32> to vector<4x64xf32>
    %126 = vector.shape_cast %123 : vector<4x64xf32> to vector<1x1x4x64xf32>
    tpu.vector_store %arg5[%c5_158, %c1_159, %c0_160, %c0_161], %126 {strides = array<i32>} : memref<8x2x4x64xf32, #tpu.memory_space<vmem>>, vector<1x1x4x64xf32>,
    %cst_162 = arith.constant dense<0.000000e+00> : vector<4x16xf32>
    %127 = tpu.matmul %113, %1, %cst_162 {dimension_numbers = #tpu.dot_dimension_numbers<[1], [0], [0], [1], [0, 0, 1, 1], [], []>} : vector<4x4xf32>, vector<4x16xf32>, vector<4x16xf32> -> vector<4x16xf32>
    %c5_163 = arith.constant 5 : index
    %c0_164 = arith.constant 0 : index
    %c0_165 = arith.constant 0 : index
    %c0_166 = arith.constant 0 : index
    %128 = vector.load %arg6[%c5_163, %c0_164, %c0_165, %c0_166] : memref<8x2x4x16xf32, #tpu.memory_space<vmem>>, vector<1x1x4x16xf32>
    %129 = vector.shape_cast %128 : vector<1x1x4x16xf32> to vector<4x16xf32>
    %130 = vector.shape_cast %127 : vector<4x16xf32> to vector<1x1x4x16xf32>
    tpu.vector_store %arg6[%c5_163, %c0_164, %c0_165, %c0_166], %130 {strides = array<i32>} : memref<8x2x4x16xf32, #tpu.memory_space<vmem>>, vector<1x1x4x16xf32>,
    %c5_167 = arith.constant 5 : index
    %c1_168 = arith.constant 1 : index
    %c0_169 = arith.constant 0 : index
    %c0_170 = arith.constant 0 : index
    %131 = vector.load %arg6[%c5_167, %c1_168, %c0_169, %c0_170] : memref<8x2x4x16xf32, #tpu.memory_space<vmem>>, vector<1x1x4x16xf32>
    %132 = vector.shape_cast %131 : vector<1x1x4x16xf32> to vector<4x16xf32>
    %133 = vector.shape_cast %127 : vector<4x16xf32> to vector<1x1x4x16xf32>
    tpu.vector_store %arg6[%c5_167, %c1_168, %c0_169, %c0_170], %133 {strides = array<i32>} : memref<8x2x4x16xf32, #tpu.memory_space<vmem>>, vector<1x1x4x16xf32>,
    %c6 = arith.constant 6 : index
    %c0_171 = arith.constant 0 : index
    %c0_172 = arith.constant 0 : index
    %134 = vector.load %arg1[%c6, %c0_171, %c0_172] : memref<8x4x4xf32, #tpu.memory_space<vmem>>, vector<1x4x4xf32>
    %135 = vector.shape_cast %134 : vector<1x4x4xf32> to vector<4x4xf32>
    %cst_173 = arith.constant dense<0.000000e+00> : vector<4x64xf32>
    %136 = tpu.matmul %135, %0, %cst_173 {dimension_numbers = #tpu.dot_dimension_numbers<[1], [0], [0], [1], [0, 0, 1, 1], [], []>} : vector<4x4xf32>, vector<4x64xf32>, vector<4x64xf32> -> vector<4x64xf32>
    %c6_174 = arith.constant 6 : index
    %c0_175 = arith.constant 0 : index
    %c0_176 = arith.constant 0 : index
    %c0_177 = arith.constant 0 : index
    %137 = vector.load %arg2[%c6_174, %c0_175, %c0_176, %c0_177] : memref<8x2x4x64xf32, #tpu.memory_space<vmem>>, vector<1x1x4x64xf32>
    %138 = vector.shape_cast %137 : vector<1x1x4x64xf32> to vector<4x64xf32>
    %139 = arith.mulf %138, %136 : vector<4x64xf32>
    %c6_178 = arith.constant 6 : index
    %c0_179 = arith.constant 0 : index
    %c0_180 = arith.constant 0 : index
    %c0_181 = arith.constant 0 : index
    %140 = vector.load %arg5[%c6_178, %c0_179, %c0_180, %c0_181] : memref<8x2x4x64xf32, #tpu.memory_space<vmem>>, vector<1x1x4x64xf32>
    %141 = vector.shape_cast %140 : vector<1x1x4x64xf32> to vector<4x64xf32>
    %142 = vector.shape_cast %139 : vector<4x64xf32> to vector<1x1x4x64xf32>
    tpu.vector_store %arg5[%c6_178, %c0_179, %c0_180, %c0_181], %142 {strides = array<i32>} : memref<8x2x4x64xf32, #tpu.memory_space<vmem>>, vector<1x1x4x64xf32>,
    %c6_182 = arith.constant 6 : index
    %c1_183 = arith.constant 1 : index
    %c0_184 = arith.constant 0 : index
    %c0_185 = arith.constant 0 : index
    %143 = vector.load %arg2[%c6_182, %c1_183, %c0_184, %c0_185] : memref<8x2x4x64xf32, #tpu.memory_space<vmem>>, vector<1x1x4x64xf32>
    %144 = vector.shape_cast %143 : vector<1x1x4x64xf32> to vector<4x64xf32>
    %145 = arith.mulf %144, %136 : vector<4x64xf32>
    %c6_186 = arith.constant 6 : index
    %c1_187 = arith.constant 1 : index
    %c0_188 = arith.constant 0 : index
    %c0_189 = arith.constant 0 : index
    %146 = vector.load %arg5[%c6_186, %c1_187, %c0_188, %c0_189] : memref<8x2x4x64xf32, #tpu.memory_space<vmem>>, vector<1x1x4x64xf32>
    %147 = vector.shape_cast %146 : vector<1x1x4x64xf32> to vector<4x64xf32>
    %148 = vector.shape_cast %145 : vector<4x64xf32> to vector<1x1x4x64xf32>
    tpu.vector_store %arg5[%c6_186, %c1_187, %c0_188, %c0_189], %148 {strides = array<i32>} : memref<8x2x4x64xf32, #tpu.memory_space<vmem>>, vector<1x1x4x64xf32>,
    %cst_190 = arith.constant dense<0.000000e+00> : vector<4x16xf32>
    %149 = tpu.matmul %135, %1, %cst_190 {dimension_numbers = #tpu.dot_dimension_numbers<[1], [0], [0], [1], [0, 0, 1, 1], [], []>} : vector<4x4xf32>, vector<4x16xf32>, vector<4x16xf32> -> vector<4x16xf32>
    %c6_191 = arith.constant 6 : index
    %c0_192 = arith.constant 0 : index
    %c0_193 = arith.constant 0 : index
    %c0_194 = arith.constant 0 : index
    %150 = vector.load %arg6[%c6_191, %c0_192, %c0_193, %c0_194] : memref<8x2x4x16xf32, #tpu.memory_space<vmem>>, vector<1x1x4x16xf32>
    %151 = vector.shape_cast %150 : vector<1x1x4x16xf32> to vector<4x16xf32>
    %152 = vector.shape_cast %149 : vector<4x16xf32> to vector<1x1x4x16xf32>
    tpu.vector_store %arg6[%c6_191, %c0_192, %c0_193, %c0_194], %152 {strides = array<i32>} : memref<8x2x4x16xf32, #tpu.memory_space<vmem>>, vector<1x1x4x16xf32>,
    %c6_195 = arith.constant 6 : index
    %c1_196 = arith.constant 1 : index
    %c0_197 = arith.constant 0 : index
    %c0_198 = arith.constant 0 : index
    %153 = vector.load %arg6[%c6_195, %c1_196, %c0_197, %c0_198] : memref<8x2x4x16xf32, #tpu.memory_space<vmem>>, vector<1x1x4x16xf32>
    %154 = vector.shape_cast %153 : vector<1x1x4x16xf32> to vector<4x16xf32>
    %155 = vector.shape_cast %149 : vector<4x16xf32> to vector<1x1x4x16xf32>
    tpu.vector_store %arg6[%c6_195, %c1_196, %c0_197, %c0_198], %155 {strides = array<i32>} : memref<8x2x4x16xf32, #tpu.memory_space<vmem>>, vector<1x1x4x16xf32>,
    %c7 = arith.constant 7 : index
    %c0_199 = arith.constant 0 : index
    %c0_200 = arith.constant 0 : index
    %156 = vector.load %arg1[%c7, %c0_199, %c0_200] : memref<8x4x4xf32, #tpu.memory_space<vmem>>, vector<1x4x4xf32>
    %157 = vector.shape_cast %156 : vector<1x4x4xf32> to vector<4x4xf32>
    %cst_201 = arith.constant dense<0.000000e+00> : vector<4x64xf32>
    %158 = tpu.matmul %157, %0, %cst_201 {dimension_numbers = #tpu.dot_dimension_numbers<[1], [0], [0], [1], [0, 0, 1, 1], [], []>} : vector<4x4xf32>, vector<4x64xf32>, vector<4x64xf32> -> vector<4x64xf32>
    %c7_202 = arith.constant 7 : index
    %c0_203 = arith.constant 0 : index
    %c0_204 = arith.constant 0 : index
    %c0_205 = arith.constant 0 : index
    %159 = vector.load %arg2[%c7_202, %c0_203, %c0_204, %c0_205] : memref<8x2x4x64xf32, #tpu.memory_space<vmem>>, vector<1x1x4x64xf32>
    %160 = vector.shape_cast %159 : vector<1x1x4x64xf32> to vector<4x64xf32>
    %161 = arith.mulf %160, %158 : vector<4x64xf32>
    %c7_206 = arith.constant 7 : index
    %c0_207 = arith.constant 0 : index
    %c0_208 = arith.constant 0 : index
    %c0_209 = arith.constant 0 : index
    %162 = vector.load %arg5[%c7_206, %c0_207, %c0_208, %c0_209] : memref<8x2x4x64xf32, #tpu.memory_space<vmem>>, vector<1x1x4x64xf32>
    %163 = vector.shape_cast %162 : vector<1x1x4x64xf32> to vector<4x64xf32>
    %164 = vector.shape_cast %161 : vector<4x64xf32> to vector<1x1x4x64xf32>
    tpu.vector_store %arg5[%c7_206, %c0_207, %c0_208, %c0_209], %164 {strides = array<i32>} : memref<8x2x4x64xf32, #tpu.memory_space<vmem>>, vector<1x1x4x64xf32>,
    %c7_210 = arith.constant 7 : index
    %c1_211 = arith.constant 1 : index
    %c0_212 = arith.constant 0 : index
    %c0_213 = arith.constant 0 : index
    %165 = vector.load %arg2[%c7_210, %c1_211, %c0_212, %c0_213] : memref<8x2x4x64xf32, #tpu.memory_space<vmem>>, vector<1x1x4x64xf32>
    %166 = vector.shape_cast %165 : vector<1x1x4x64xf32> to vector<4x64xf32>
    %167 = arith.mulf %166, %158 : vector<4x64xf32>
    %c7_214 = arith.constant 7 : index
    %c1_215 = arith.constant 1 : index
    %c0_216 = arith.constant 0 : index
    %c0_217 = arith.constant 0 : index
    %168 = vector.load %arg5[%c7_214, %c1_215, %c0_216, %c0_217] : memref<8x2x4x64xf32, #tpu.memory_space<vmem>>, vector<1x1x4x64xf32>
    %169 = vector.shape_cast %168 : vector<1x1x4x64xf32> to vector<4x64xf32>
    %170 = vector.shape_cast %167 : vector<4x64xf32> to vector<1x1x4x64xf32>
    tpu.vector_store %arg5[%c7_214, %c1_215, %c0_216, %c0_217], %170 {strides = array<i32>} : memref<8x2x4x64xf32, #tpu.memory_space<vmem>>, vector<1x1x4x64xf32>,
    %cst_218 = arith.constant dense<0.000000e+00> : vector<4x16xf32>
    %171 = tpu.matmul %157, %1, %cst_218 {dimension_numbers = #tpu.dot_dimension_numbers<[1], [0], [0], [1], [0, 0, 1, 1], [], []>} : vector<4x4xf32>, vector<4x16xf32>, vector<4x16xf32> -> vector<4x16xf32>
    %c7_219 = arith.constant 7 : index
    %c0_220 = arith.constant 0 : index
    %c0_221 = arith.constant 0 : index
    %c0_222 = arith.constant 0 : index
    %172 = vector.load %arg6[%c7_219, %c0_220, %c0_221, %c0_222] : memref<8x2x4x16xf32, #tpu.memory_space<vmem>>, vector<1x1x4x16xf32>
    %173 = vector.shape_cast %172 : vector<1x1x4x16xf32> to vector<4x16xf32>
    %174 = vector.shape_cast %171 : vector<4x16xf32> to vector<1x1x4x16xf32>
    tpu.vector_store %arg6[%c7_219, %c0_220, %c0_221, %c0_222], %174 {strides = array<i32>} : memref<8x2x4x16xf32, #tpu.memory_space<vmem>>, vector<1x1x4x16xf32>,
    %c7_223 = arith.constant 7 : index
    %c1_224 = arith.constant 1 : index
    %c0_225 = arith.constant 0 : index
    %c0_226 = arith.constant 0 : index
    %175 = vector.load %arg6[%c7_223, %c1_224, %c0_225, %c0_226] : memref<8x2x4x16xf32, #tpu.memory_space<vmem>>, vector<1x1x4x16xf32>
    %176 = vector.shape_cast %175 : vector<1x1x4x16xf32> to vector<4x16xf32>
    %177 = vector.shape_cast %171 : vector<4x16xf32> to vector<1x1x4x16xf32>
    tpu.vector_store %arg6[%c7_223, %c1_224, %c0_225, %c0_226], %177 {strides = array<i32>} : memref<8x2x4x16xf32, #tpu.memory_space<vmem>>, vector<1x1x4x16xf32>,
    return
  }
  func.func @transform_0(%arg0: i32) -> (i32, i32, i32) {
    %c0_i32 = arith.constant 0 : i32
    %c0_i32_0 = arith.constant 0 : i32
    %c0_i32_1 = arith.constant 0 : i32
    return %arg0, %c0_i32, %c0_i32_0 : i32, i32, i32
  }
  func.func @transform_1(%arg0: i32) -> (i32, i32, i32, i32) {
    %c0_i32 = arith.constant 0 : i32
    %c0_i32_0 = arith.constant 0 : i32
    %c0_i32_1 = arith.constant 0 : i32
    %c0_i32_2 = arith.constant 0 : i32
    return %arg0, %c0_i32, %c0_i32_0, %c0_i32_1 : i32, i32, i32, i32
  }
  func.func @transform_2(%arg0: i32) -> (i32, i32) {
    %c0_i32 = arith.constant 0 : i32
    %c0_i32_0 = arith.constant 0 : i32
    %c0_i32_1 = arith.constant 0 : i32
    return %c0_i32, %c0_i32_0 : i32, i32
  }
  func.func @transform_3(%arg0: i32) -> (i32, i32) {
    %c0_i32 = arith.constant 0 : i32
    %c0_i32_0 = arith.constant 0 : i32
    %c0_i32_1 = arith.constant 0 : i32
    return %c0_i32, %c0_i32_0 : i32, i32
  }
  func.func @transform_4(%arg0: i32) -> (i32, i32, i32, i32) {
    %c0_i32 = arith.constant 0 : i32
    %c0_i32_0 = arith.constant 0 : i32
    %c0_i32_1 = arith.constant 0 : i32
    %c0_i32_2 = arith.constant 0 : i32
    return %arg0, %c0_i32, %c0_i32_0, %c0_i32_1 : i32, i32, i32, i32
  }
  func.func @transform_5(%arg0: i32) -> (i32, i32, i32, i32) {
    %c0_i32 = arith.constant 0 : i32
    %c0_i32_0 = arith.constant 0 : i32
    %c0_i32_1 = arith.constant 0 : i32
    %c0_i32_2 = arith.constant 0 : i32
    return %arg0, %c0_i32, %c0_i32_0, %c0_i32_1 : i32, i32, i32, i32
  }
}

</mosaic_0001>

<llo_original>
// kernel: attention_block_forward.2
$region0: #{attention_block_forward.2}
  #allocation0 [shape = 'u32[]', space=smem, size = 0x4, offset = 0x4, fixed_abs, tag = 'smem constant byte address 0x4 - core index']
  #allocation1 [shape = 'u32[144,128]{1,0:T(1,128)}', space=vmem, size = 0x12000, scoped, tag = 'internal scratch']
  #allocation2 [shape = 'f32[1,1]{1,0:T(1,128)S(1)}', space=vmem, size = 0x200, scoped, tag = 'scoped memory for attention_block_forward.2']
  %s0 = inlined_call_operand.vmem [shape: f32[2,6,64], index: 0, kind: input, shape index: {}]
  %s1 = inlined_call_operand.vmem [shape: f32[2,4,64], index: 1, kind: input, shape index: {}]
  %s2 = inlined_call_operand.vmem [shape: f32[16,6], index: 2, kind: input, shape index: {}]
  %s3 = inlined_call_operand.vmem [shape: f32[16,4], index: 3, kind: input, shape index: {}]
  %s4 = inlined_call_operand.vmem [shape: f32[16,1], index: 4, kind: input, shape index: {}]
  %s5 = inlined_call_operand.vmem [shape: f32[1,8], index: 5, kind: input, shape index: {}]
  %s6 = inlined_call_operand.<no memory space> [shape: f32[1,1], index: 6, kind: input, shape index: {}]
  %s7 = inlined_call_operand.vmem [shape: f32[2,1,64], index: 7, kind: output, shape index: {}]
  %s8 = sld [smem:[#allocation0]]
  $region61: #{attention_block_forward.2} parent=0
    _
  %s10 = ssub.s32 1, %s8
  %s11 = scalar_select 0, %s10, %s8
  %v12 = vstv %s6
  %13 = vst [vmem:[#allocation2] sm:$0x1] %v12
  loop: start=0, step=1, limit=4
  $region2: #{attention_block_forward.2} parent=0 // loop_pre_header
    _
  $region3: #{attention_block_forward.2} parent=0 // loop_header
    %s15 = sphi 0, %s19
    %p16 = scmp.ge.s32.totalorder %s15, 4
    %s25 = sphi 0, %s27
    %s28 = sphi 0, %s25
    %s29 = sphi 0, %s28
    %s45 = sphi 0, %s29
    %s51 = sphi 0, %s53
    %s54 = sphi 0, %s51
    %s55 = sphi 0, %s54
    %s71 = sphi 0, %s55
    %s75 = sphi 0, %s75
    %s77 = sphi 0, %s75
    %s78 = sphi 0, %s77
    %s92 = sphi 0, %s78
    %s96 = sphi 0, %s96
    %s98 = sphi 0, %s96
    %s99 = sphi 0, %s98
    %s113 = sphi 0, %s99
    %s117 = sphi 0, %s117
    %s119 = sphi 0, %s117
    %s120 = sphi 0, %s119
    %s134 = sphi 0, %s120
    %s138 = sphi 0, %s138
    %s140 = sphi 0, %s138
    %s141 = sphi 0, %s140
    %s155 = sphi 0, %s141
    %s159 = sphi 0, %s159
    %s161 = sphi 0, %s159
    %s162 = sphi 0, %s161
    %s176 = sphi 0, %s162
    %s182 = sphi 0, %s184
    %s185 = sphi 0, %s182
    %s186 = sphi 0, %s185
    %s202 = sphi 0, %s186
  $region4: #{attention_block_forward.2} parent=0 // loop_header_branch
    %18 = sbr.rel (%p16) target = $region8
  $region5: #{attention_block_forward.2} parent=0 // loop_body
    %s20 = ssub.s32 %s15, 1
    %s21 = ssub.s32 %s15, 2
    %s22 = sadd.s32 %s15, 1
    %s23 = ssub.s32 %s15, %s22
    %p24 = scmp.eq.s32.totalorder %s23, 0
    %s26 = sadd.s32 %s25, 1
    %s27 = scalar_select %p24, %s25, %s26
    %p30 = pneg %p24
    %p31 = scmp.eq.s32.totalorder %s15, 1
    %p32 = por %p30, %p31
    %p33 = scmp.ne.s32.totalorder %s25, %s28
    %p34 = scmp.eq.s32.totalorder %s15, 0
    %p35 = por %p33, %p34
    %p36 = scmp.ne.s32.totalorder %s25, %s28
    %p37 = scmp.eq.s32.totalorder %s20, 1
    %p38 = por %p36, %p37
    %p39 = scmp.ne.s32.totalorder %s28, %s29
    %p40 = scmp.eq.s32.totalorder %s20, 0
    %p41 = por %p39, %p40
    %p42 = scmp.ne.s32.totalorder %s28, %s29
    %p43 = scmp.eq.s32.totalorder %s21, 1
    %p44 = por %p42, %p43
    %p46 = scmp.ne.s32.totalorder %s29, %s45
    %p47 = scmp.eq.s32.totalorder %s21, 0
    %p48 = por %p46, %p47
    %s49 = ssub.s32 %s15, %s22
    %p50 = scmp.eq.s32.totalorder %s49, 0
    %s52 = sadd.s32 %s51, 1
    %s53 = scalar_select %p50, %s51, %s52
    %p56 = pneg %p50
    %p57 = scmp.eq.s32.totalorder %s15, 1
    %p58 = por %p56, %p57
    %p59 = scmp.ne.s32.totalorder %s51, %s54
    %p60 = scmp.eq.s32.totalorder %s15, 0
    %p61 = por %p59, %p60
    %p62 = scmp.ne.s32.totalorder %s51, %s54
    %p63 = scmp.eq.s32.totalorder %s20, 1
    %p64 = por %p62, %p63
    %p65 = scmp.ne.s32.totalorder %s54, %s55
    %p66 = scmp.eq.s32.totalorder %s20, 0
    %p67 = por %p65, %p66
    %p68 = scmp.ne.s32.totalorder %s54, %s55
    %p69 = scmp.eq.s32.totalorder %s21, 1
    %p70 = por %p68, %p69
    %p72 = scmp.ne.s32.totalorder %s55, %s71
    %p73 = scmp.eq.s32.totalorder %s21, 0
    %p74 = por %p72, %p73
    %s76 = sadd.s32 %s75, 1
    %p79 = scmp.eq.s32.totalorder %s15, 1
    %p80 = scmp.ne.s32.totalorder %s75, %s77
    %p81 = scmp.eq.s32.totalorder %s15, 0
    %p82 = por %p80, %p81
    %p83 = scmp.ne.s32.totalorder %s75, %s77
    %p84 = scmp.eq.s32.totalorder %s20, 1
    %p85 = por %p83, %p84
    %p86 = scmp.ne.s32.totalorder %s77, %s78
    %p87 = scmp.eq.s32.totalorder %s20, 0
    %p88 = por %p86, %p87
    %p89 = scmp.ne.s32.totalorder %s77, %s78
    %p90 = scmp.eq.s32.totalorder %s21, 1
    %p91 = por %p89, %p90
    %p93 = scmp.ne.s32.totalorder %s78, %s92
    %p94 = scmp.eq.s32.totalorder %s21, 0
    %p95 = por %p93, %p94
    %s97 = sadd.s32 %s96, 1
    %p100 = scmp.eq.s32.totalorder %s15, 1
    %p101 = scmp.ne.s32.totalorder %s96, %s98
    %p102 = scmp.eq.s32.totalorder %s15, 0
    %p103 = por %p101, %p102
    %p104 = scmp.ne.s32.totalorder %s96, %s98
    %p105 = scmp.eq.s32.totalorder %s20, 1
    %p106 = por %p104, %p105
    %p107 = scmp.ne.s32.totalorder %s98, %s99
    %p108 = scmp.eq.s32.totalorder %s20, 0
    %p109 = por %p107, %p108
    %p110 = scmp.ne.s32.totalorder %s98, %s99
    %p111 = scmp.eq.s32.totalorder %s21, 1
    %p112 = por %p110, %p111
    %p114 = scmp.ne.s32.totalorder %s99, %s113
    %p115 = scmp.eq.s32.totalorder %s21, 0
    %p116 = por %p114, %p115
    %s118 = sadd.s32 %s117, 1
    %p121 = scmp.eq.s32.totalorder %s15, 1
    %p122 = scmp.ne.s32.totalorder %s117, %s119
    %p123 = scmp.eq.s32.totalorder %s15, 0
    %p124 = por %p122, %p123
    %p125 = scmp.ne.s32.totalorder %s117, %s119
    %p126 = scmp.eq.s32.totalorder %s20, 1
    %p127 = por %p125, %p126
    %p128 = scmp.ne.s32.totalorder %s119, %s120
    %p129 = scmp.eq.s32.totalorder %s20, 0
    %p130 = por %p128, %p129
    %p131 = scmp.ne.s32.totalorder %s119, %s120
    %p132 = scmp.eq.s32.totalorder %s21, 1
    %p133 = por %p131, %p132
    %p135 = scmp.ne.s32.totalorder %s120, %s134
    %p136 = scmp.eq.s32.totalorder %s21, 0
    %p137 = por %p135, %p136
    %s139 = sadd.s32 %s138, 1
    %p142 = scmp.eq.s32.totalorder %s15, 1
    %p143 = scmp.ne.s32.totalorder %s138, %s140
    %p144 = scmp.eq.s32.totalorder %s15, 0
    %p145 = por %p143, %p144
    %p146 = scmp.ne.s32.totalorder %s138, %s140
    %p147 = scmp.eq.s32.totalorder %s20, 1
    %p148 = por %p146, %p147
    %p149 = scmp.ne.s32.totalorder %s140, %s141
    %p150 = scmp.eq.s32.totalorder %s20, 0
    %p151 = por %p149, %p150
    %p152 = scmp.ne.s32.totalorder %s140, %s141
    %p153 = scmp.eq.s32.totalorder %s21, 1
    %p154 = por %p152, %p153
    %p156 = scmp.ne.s32.totalorder %s141, %s155
    %p157 = scmp.eq.s32.totalorder %s21, 0
    %p158 = por %p156, %p157
    %s160 = sadd.s32 %s159, 1
    %p163 = scmp.eq.s32.totalorder %s15, 1
    %p164 = scmp.ne.s32.totalorder %s159, %s161
    %p165 = scmp.eq.s32.totalorder %s15, 0
    %p166 = por %p164, %p165
    %p167 = scmp.ne.s32.totalorder %s159, %s161
    %p168 = scmp.eq.s32.totalorder %s20, 1
    %p169 = por %p167, %p168
    %p170 = scmp.ne.s32.totalorder %s161, %s162
    %p171 = scmp.eq.s32.totalorder %s20, 0
    %p172 = por %p170, %p171
    %p173 = scmp.ne.s32.totalorder %s161, %s162
    %p174 = scmp.eq.s32.totalorder %s21, 1
    %p175 = por %p173, %p174
    %p177 = scmp.ne.s32.totalorder %s162, %s176
    %p178 = scmp.eq.s32.totalorder %s21, 0
    %p179 = por %p177, %p178
    %s180 = ssub.s32 %s15, %s22
    %p181 = scmp.eq.s32.totalorder %s180, 0
    %s183 = sadd.s32 %s182, 1
    %s184 = scalar_select %p181, %s182, %s183
    %p187 = pneg %p181
    %p188 = scmp.eq.s32.totalorder %s15, 1
    %p189 = por %p187, %p188
    %p190 = scmp.ne.s32.totalorder %s182, %s185
    %p191 = scmp.eq.s32.totalorder %s15, 0
    %p192 = por %p190, %p191
    %p193 = scmp.ne.s32.totalorder %s182, %s185
    %p194 = scmp.eq.s32.totalorder %s20, 1
    %p195 = por %p193, %p194
    %p196 = scmp.ne.s32.totalorder %s185, %s186
    %p197 = scmp.eq.s32.totalorder %s20, 0
    %p198 = por %p196, %p197
    %p199 = scmp.ne.s32.totalorder %s185, %s186
    %p200 = scmp.eq.s32.totalorder %s21, 1
    %p201 = por %p199, %p200
    %p203 = scmp.ne.s32.totalorder %s186, %s202
    %p204 = scmp.eq.s32.totalorder %s21, 0
    %p205 = por %p203, %p204
    %p206 = scmp.le.s32.totalorder 1, %s15
    %p207 = scmp.lt.s32.totalorder %s15, 3
    %p208 = pnand %p206, %p207
    %p209 = pneg %p208
    // Predicated region
    $region9: #{attention_block_forward.2} parent=5 // pred_check
      _
    $region10: #{attention_block_forward.2} parent=5 // pred_check_branch
      %211 = sbr.rel (%p208) target = $region12
    $region11: #{attention_block_forward.2} parent=5 // pred_region
      %s212 = ssub.s32 %s15, 1
      // Predicated region
      $region13: #{attention_block_forward.2} parent=11 // pred_check
        %p213 = pneg %p88
      $region14: #{attention_block_forward.2} parent=11 // pred_check_branch
        %215 = sbr.rel (%p213) target = $region16
      $region15: #{attention_block_forward.2} parent=11 // pred_region
        _
      $region16: #{attention_block_forward.2} parent=11 // pred_fallthru
        _
      // Predicated region
      $region17: #{attention_block_forward.2} parent=11 // pred_check
        %p216 = pneg %p109
      $region18: #{attention_block_forward.2} parent=11 // pred_check_branch
        %218 = sbr.rel (%p216) target = $region20
      $region19: #{attention_block_forward.2} parent=11 // pred_region
        _
      $region20: #{attention_block_forward.2} parent=11 // pred_fallthru
        _
      // Predicated region
      $region21: #{attention_block_forward.2} parent=11 // pred_check
        %p219 = pneg %p130
      $region22: #{attention_block_forward.2} parent=11 // pred_check_branch
        %221 = sbr.rel (%p219) target = $region24
      $region23: #{attention_block_forward.2} parent=11 // pred_region
        _
      $region24: #{attention_block_forward.2} parent=11 // pred_fallthru
        _
      // Predicated region
      $region25: #{attention_block_forward.2} parent=11 // pred_check
        %p222 = pneg %p151
      $region26: #{attention_block_forward.2} parent=11 // pred_check_branch
        %224 = sbr.rel (%p222) target = $region28
      $region27: #{attention_block_forward.2} parent=11 // pred_region
        _
      $region28: #{attention_block_forward.2} parent=11 // pred_fallthru
        _
      // Predicated region
      $region29: #{attention_block_forward.2} parent=11 // pred_check
        %p225 = pneg %p172
      $region30: #{attention_block_forward.2} parent=11 // pred_check_branch
        %227 = sbr.rel (%p225) target = $region32
      $region31: #{attention_block_forward.2} parent=11 // pred_region
        _
      $region32: #{attention_block_forward.2} parent=11 // pred_fallthru
        _
    $region12: #{attention_block_forward.2} parent=5 // pred_fallthru
      _
    %p228 = scmp.lt.s32.totalorder %s15, 2
    // Predicated region
    $region33: #{attention_block_forward.2} parent=5 // pred_check
      %p229 = pneg %p228
    $region34: #{attention_block_forward.2} parent=5 // pred_check_branch
      %231 = sbr.rel (%p229) target = $region36
    $region35: #{attention_block_forward.2} parent=5 // pred_region
      // Predicated region
      $region37: #{attention_block_forward.2} parent=35 // pred_check
        %p232 = pneg %p35
      $region38: #{attention_block_forward.2} parent=35 // pred_check_branch
        %234 = sbr.rel (%p232) target = $region40
      $region39: #{attention_block_forward.2} parent=35 // pred_region
        %p235 = scmp.lt.s32.totalorder %s15, 1
        %s236 = scalar_select %p235, %s15, 1
        %s237 = smul.addr %s236, 8
        %s238 = scalar_lea.vmem %s0, %s237
      $region40: #{attention_block_forward.2} parent=35 // pred_fallthru
        _
      // Predicated region
      $region41: #{attention_block_forward.2} parent=35 // pred_check
        %p239 = pneg %p61
      $region42: #{attention_block_forward.2} parent=35 // pred_check_branch
        %241 = sbr.rel (%p239) target = $region44
      $region43: #{attention_block_forward.2} parent=35 // pred_region
        %p242 = scmp.lt.s32.totalorder %s15, 1
        %s243 = scalar_select %p242, %s15, 1
        %s244 = smul.addr %s243, 4
        %s245 = scalar_lea.vmem %s1, %s244
      $region44: #{attention_block_forward.2} parent=35 // pred_fallthru
        _
    $region36: #{attention_block_forward.2} parent=5 // pred_fallthru
      _
    %p246 = scmp.le.s32.totalorder 1, %s15
    %p247 = scmp.lt.s32.totalorder %s15, 3
    %p248 = pnand %p246, %p247
    %p249 = pneg %p248
    // Predicated region
    $region45: #{attention_block_forward.2} parent=5 // pred_check
      _
    $region46: #{attention_block_forward.2} parent=5 // pred_check_branch
      %251 = sbr.rel (%p248) target = $region48
    $region47: #{attention_block_forward.2} parent=5 // pred_region
      %s252 = ssub.s32 %s15, 1
      %p253 = scmp.lt.s32.totalorder %s20, 1
      %s254 = scalar_select %p253, %s20, 1
      %s255 = smul.addr %s254, 8
      %s256 = scalar_lea.vmem %s0, %s255
      %p257 = pneg %p41
      %p258 = pneg %p38
      %p259 = scmp.lt.s32.totalorder %s20, 1
      %s260 = scalar_select %p259, %s20, 1
      %s261 = smul.addr %s260, 4
      %s262 = scalar_lea.vmem %s1, %s261
      %p263 = pneg %p67
      %p264 = pneg %p64
      %p265 = pneg %p88
      %p266 = pneg %p85
      %p267 = pneg %p109
      %p268 = pneg %p106
      %p269 = pneg %p130
      %p270 = pneg %p127
      %p271 = pneg %p151
      %p272 = pneg %p148
      %p273 = pneg %p172
      %p274 = pneg %p169
      %p275 = pneg %p198
      %p276 = pneg %p195
      %p277 = scmp.lt.s32.totalorder %s20, 1
      %s278 = scalar_select %p277, %s20, 1
      %s279 = scalar_lea.vmem %s7, %s278
      %p280 = scmp.lt.s32.totalorder %s20, 1
      %s281 = scalar_select %p280, %s20, 1
      %s282 = smul.addr %s281, 8
      %s283 = scalar_lea.vmem %s0, %s282
      %p284 = scmp.lt.s32.totalorder %s20, 1
      %s285 = scalar_select %p284, %s20, 1
      %s286 = smul.addr %s285, 4
      %s287 = scalar_lea.vmem %s1, %s286
      %p288 = scmp.lt.s32.totalorder %s20, 1
      %s289 = scalar_select %p288, %s20, 1
      %s290 = scalar_lea.vmem %s7, %s289
      %v291 = vld [vmem:[%s283] sm:$0x3f]
      %v292 = vld [vmem:[%s287] sm:$0xf]
      %v293 = vld [vmem:[%s2] sm:$0xff]
      %v294 = vld [vmem:[%s2 + $0x8] sm:$0xff]
      %v295 = vld [vmem:[%s3] sm:$0xff]
      %v296 = vld [vmem:[%s3 + $0x8] sm:$0xff]
      %vm297 = vcmask 31744
      %v299 = vsel %vm297, %v295, 0
      %v302 = vsel %vm297, %v296, 0
      %vm304 = vcmask 1043456
      %v306 = vsel %vm304, %v292, 0
      %308 = vmatprep.subr.mxu0 0.0
      %309 = vmatpush1.msra.mxu0 %v306
      %310 = vmatprep.subr.mxu0 0.0
      %311 = vmatpush1.msra.mxu0 0.0
      %312 = vmatprep.subr.mxu0 0.0
      %313 = vmatpush1.msra.mxu0 0.0
      %314 = vmatprep.subr.mxu0 0.0
      %315 = vmatpush1.msra.mxu0 0.0
      %316 = vmatprep.subr.mxu0 0.0
      %317 = vmatpush1.msra.mxu0 0.0
      %318 = vmatprep.subr.mxu0 0.0
      %319 = vmatpush1.msra.mxu0 0.0
      %320 = vmatprep.subr.mxu0 0.0
      %321 = vmatpush1.msra.mxu0 0.0
      %322 = vmatprep.subr.mxu0 0.0
      %323 = vmatpush1.msra.mxu0 0.0
      %324 = vmatprep.subr.mxu0 0.0
      %325 = vmatpush1.msra.mxu0 0.0
      %326 = vmatprep.subr.mxu0 0.0
      %327 = vmatpush1.msra.mxu0 0.0
      %328 = vmatprep.subr.mxu0 0.0
      %329 = vmatpush1.msra.mxu0 0.0
      %330 = vmatprep.subr.mxu0 0.0
      %331 = vmatpush1.msra.mxu0 0.0
      %332 = vmatprep.subr.mxu0 0.0
      %333 = vmatpush1.msra.mxu0 0.0
      %334 = vmatprep.subr.mxu0 0.0
      %335 = vmatpush1.msra.mxu0 0.0
      %336 = vmatprep.subr.mxu0 0.0
      %337 = vmatpush1.msra.mxu0 0.0
      %338 = vmatprep.subr.mxu0 0.0
      %339 = vmatpush1.msra.mxu0 0.0
      %340 = vmatprep.subr.mxu0 0.0
      %341 = vmatpush1.msra.mxu0 0.0
      %342 = vmatprep.subr.mxu0 0.0
      %343 = vmatpush1.msra.mxu0 0.0
      %344 = vmatprep.subr.mxu0 0.0
      %345 = vmatpush1.msra.mxu0 0.0
      %346 = vmatprep.subr.mxu0 0.0
      %347 = vmatpush1.msra.mxu0 0.0
      %348 = vmatprep.subr.mxu0 0.0
      %349 = vmatpush1.msra.mxu0 0.0
      %350 = vmatprep.subr.mxu0 0.0
      %351 = vmatpush1.msra.mxu0 0.0
      %352 = vmatprep.subr.mxu0 0.0
      %353 = vmatpush1.msra.mxu0 0.0
      %354 = vmatprep.subr.mxu0 0.0
      %355 = vmatpush1.msra.mxu0 0.0
      %356 = vmatprep.subr.mxu0 0.0
      %357 = vmatpush1.msra.mxu0 0.0
      %358 = vmatprep.subr.mxu0 0.0
      %359 = vmatpush1.msra.mxu0 0.0
      %360 = vmatprep.subr.mxu0 0.0
      %361 = vmatpush1.msra.mxu0 0.0
      %362 = vmatprep.subr.mxu0 0.0
      %363 = vmatpush1.msra.mxu0 0.0
      %364 = vmatprep.subr.mxu0 0.0
      %365 = vmatpush1.msra.mxu0 0.0
      %366 = vmatprep.subr.mxu0 0.0
      %367 = vmatpush1.msra.mxu0 0.0
      %368 = vmatprep.subr.mxu0 0.0
      %369 = vmatpush1.msra.mxu0 0.0
      %370 = vmatprep.subr.mxu0 0.0
      %371 = vmatpush1.msra.mxu0 0.0
      %372 = vmatprep.mubr.f32.mxu0 0.0
      %373 = vmatmul.mubr.f32.gmra.mrb[0].mxu0 %v299
      %v374 = vpop.f32.mrb[0].mxu0
      %v375 = vadd.f32 0.0, %v374
      %v376 = vpop.f32.mrb[0].mxu0
      %377 = vmatprep.mubr.f32.mxu0 0.0
      %378 = vmatmul.mubr.f32.gmra.mrb[0].mxu0 %v302
      %v379 = vpop.f32.mrb[0].mxu0
      %v380 = vadd.f32 0.0, %v379
      %v381 = vpop.f32.mrb[0].mxu0
      %382 = vdwg.mxu0
      %vm383 = vcmask 48128
      %v385 = vsel %vm383, %v293, 0
      %v388 = vsel %vm383, %v294, 0
      %vm390 = vcmask 1045504
      %v392 = vsel %vm390, %v291, 0
      %394 = vmatprep.subr.mxu0 0.0
      %395 = vmatpush1.msra.mxu0 %v392
      %396 = vmatprep.subr.mxu0 0.0
      %397 = vmatpush1.msra.mxu0 0.0
      %398 = vmatprep.subr.mxu0 0.0
      %399 = vmatpush1.msra.mxu0 0.0
      %400 = vmatprep.subr.mxu0 0.0
      %401 = vmatpush1.msra.mxu0 0.0
      %402 = vmatprep.subr.mxu0 0.0
      %403 = vmatpush1.msra.mxu0 0.0
      %404 = vmatprep.subr.mxu0 0.0
      %405 = vmatpush1.msra.mxu0 0.0
      %406 = vmatprep.subr.mxu0 0.0
      %407 = vmatpush1.msra.mxu0 0.0
      %408 = vmatprep.subr.mxu0 0.0
      %409 = vmatpush1.msra.mxu0 0.0
      %410 = vmatprep.subr.mxu0 0.0
      %411 = vmatpush1.msra.mxu0 0.0
      %412 = vmatprep.subr.mxu0 0.0
      %413 = vmatpush1.msra.mxu0 0.0
      %414 = vmatprep.subr.mxu0 0.0
      %415 = vmatpush1.msra.mxu0 0.0
      %416 = vmatprep.subr.mxu0 0.0
      %417 = vmatpush1.msra.mxu0 0.0
      %418 = vmatprep.subr.mxu0 0.0
      %419 = vmatpush1.msra.mxu0 0.0
      %420 = vmatprep.subr.mxu0 0.0
      %421 = vmatpush1.msra.mxu0 0.0
      %422 = vmatprep.subr.mxu0 0.0
      %423 = vmatpush1.msra.mxu0 0.0
      %424 = vmatprep.subr.mxu0 0.0
      %425 = vmatpush1.msra.mxu0 0.0
      %426 = vmatprep.subr.mxu0 0.0
      %427 = vmatpush1.msra.mxu0 0.0
      %428 = vmatprep.subr.mxu0 0.0
      %429 = vmatpush1.msra.mxu0 0.0
      %430 = vmatprep.subr.mxu0 0.0
      %431 = vmatpush1.msra.mxu0 0.0
      %432 = vmatprep.subr.mxu0 0.0
      %433 = vmatpush1.msra.mxu0 0.0
      %434 = vmatprep.subr.mxu0 0.0
      %435 = vmatpush1.msra.mxu0 0.0
      %436 = vmatprep.subr.mxu0 0.0
      %437 = vmatpush1.msra.mxu0 0.0
      %438 = vmatprep.subr.mxu0 0.0
      %439 = vmatpush1.msra.mxu0 0.0
      %440 = vmatprep.subr.mxu0 0.0
      %441 = vmatpush1.msra.mxu0 0.0
      %442 = vmatprep.subr.mxu0 0.0
      %443 = vmatpush1.msra.mxu0 0.0
      %444 = vmatprep.subr.mxu0 0.0
      %445 = vmatpush1.msra.mxu0 0.0
      %446 = vmatprep.subr.mxu0 0.0
      %447 = vmatpush1.msra.mxu0 0.0
      %448 = vmatprep.subr.mxu0 0.0
      %449 = vmatpush1.msra.mxu0 0.0
      %450 = vmatprep.subr.mxu0 0.0
      %451 = vmatpush1.msra.mxu0 0.0
      %452 = vmatprep.subr.mxu0 0.0
      %453 = vmatpush1.msra.mxu0 0.0
      %454 = vmatprep.subr.mxu0 0.0
      %455 = vmatpush1.msra.mxu0 0.0
      %456 = vmatprep.subr.mxu0 0.0
      %457 = vmatpush1.msra.mxu0 0.0
      %458 = vmatprep.mubr.f32.mxu0 0.0
      %459 = vmatmul.mubr.f32.gmra.mrb[0].mxu0 %v385
      %v460 = vpop.f32.mrb[0].mxu0
      %v461 = vadd.f32 %v375, %v460
      %v462 = vpop.f32.mrb[0].mxu0
      %463 = vmatprep.mubr.f32.mxu0 0.0
      %464 = vmatmul.mubr.f32.gmra.mrb[0].mxu0 %v388
      %v465 = vpop.f32.mrb[0].mxu0
      %v466 = vadd.f32 %v380, %v465
      %v467 = vpop.f32.mrb[0].mxu0
      %468 = vdwg.mxu0
      %v469 = vld [vmem:[%s4] sm:$0xff]
      %v470 = vld [vmem:[%s4 + $0x8] sm:$0xff]
      %472 = vset.pattern.permute.xlu0 0
      %473 = vperm.xlu0 %472, %v469
      %v474 = vpop.permute.xlu0 %473
      %477 = vset.pattern.permute.xlu0 0
      %478 = vperm.xlu0 %477, %v470
      %v479 = vpop.permute.xlu0 %478
      %v481 = vadd.f32 %v461, %v474
      %v482 = vadd.f32 %v466, %v479
      %vm483 = vcmask 523264
      %v484 = vsel %vm483, %v481, 0.0
      %485 = vadd.xlane.f32.xlu0 %v484
      %v486 = vpop.xlane.xlu0 %485
      %v487 = vsel %vm483, %v482, 0.0
      %488 = vadd.xlane.f32.xlu0 %v487
      %v489 = vpop.xlane.xlu0 %488
      %v490 = vrcp.pop 64.0
      %v491 = vmul.f32 %v486, %v490
      %v492 = vmul.f32 %v489, %v490
      %v493 = vsub.f32 %v481, %v491
      %v494 = vsub.f32 %v482, %v492
      %v495 = vmul.f32 %v493, %v493
      %v496 = vmul.f32 %v494, %v494
      %v497 = vsel %vm483, %v495, 0.0
      %498 = vadd.xlane.f32.xlu0 %v497
      %v499 = vpop.xlane.xlu0 %498
      %v500 = vsel %vm483, %v496, 0.0
      %501 = vadd.xlane.f32.xlu0 %v500
      %v502 = vpop.xlane.xlu0 %501
      %v503 = vmul.f32 %v499, %v490
      %v504 = vmul.f32 %v502, %v490
      %v505 = vadd.f32 %v503, 1e-05
      %v506 = vadd.f32 %v504, 1e-05
      %v507 = vrsqrt.pop %v505
      %v508 = vrsqrt.pop %v506
      %v509 = vmul.f32 %v493, %v507
      %v510 = vmul.f32 %v494, %v508
      %v511 = vadd.f32 %v509, %v510
      %vm512 = vcmp.ge.f32.partialorder %v511, 0.0
      %v513 = vmul.f32 %v511, 0.01
      %v514 = vsel %vm512, %v511, %v513
      %v515 = vld [vmem:[%s5] sm:$0x1]
      %v516 = vld [vmem:[#allocation2] sm:$0x1]
      %518 = vset.pattern.permute.xlu0 0
      %519 = vperm.xlu0 %518, %v516
      %v520 = vpop.permute.xlu0 %519
      %v522 = vlaneseq
      %v523 = vshrl.u32 %v522, 7
      %v524 = vsub.s32 0, %v523
      %v525 = vrot.slane %v520, %v524
      %vm526 = vcmask 64512
      %v528 = vsel %vm526, %v515, 0
      %530 = vmatprep.subr.mxu0 0.0
      %531 = vmatpush1.msra.mxu0 %v514
      %532 = vmatprep.subr.mxu0 0.0
      %533 = vmatpush1.msra.mxu0 0.0
      %534 = vmatprep.subr.mxu0 0.0
      %535 = vmatpush1.msra.mxu0 0.0
      %536 = vmatprep.subr.mxu0 0.0
      %537 = vmatpush1.msra.mxu0 0.0
      %538 = vmatprep.subr.mxu0 0.0
      %539 = vmatpush1.msra.mxu0 0.0
      %540 = vmatprep.subr.mxu0 0.0
      %541 = vmatpush1.msra.mxu0 0.0
      %542 = vmatprep.subr.mxu0 0.0
      %543 = vmatpush1.msra.mxu0 0.0
      %544 = vmatprep.subr.mxu0 0.0
      %545 = vmatpush1.msra.mxu0 0.0
      %546 = vmatprep.subr.mxu0 0.0
      %547 = vmatpush1.msra.mxu0 0.0
      %548 = vmatprep.subr.mxu0 0.0
      %549 = vmatpush1.msra.mxu0 0.0
      %550 = vmatprep.subr.mxu0 0.0
      %551 = vmatpush1.msra.mxu0 0.0
      %552 = vmatprep.subr.mxu0 0.0
      %553 = vmatpush1.msra.mxu0 0.0
      %554 = vmatprep.subr.mxu0 0.0
      %555 = vmatpush1.msra.mxu0 0.0
      %556 = vmatprep.subr.mxu0 0.0
      %557 = vmatpush1.msra.mxu0 0.0
      %558 = vmatprep.subr.mxu0 0.0
      %559 = vmatpush1.msra.mxu0 0.0
      %560 = vmatprep.subr.mxu0 0.0
      %561 = vmatpush1.msra.mxu0 0.0
      %562 = vmatprep.subr.mxu0 0.0
      %563 = vmatpush1.msra.mxu0 0.0
      %564 = vmatprep.subr.mxu0 0.0
      %565 = vmatpush1.msra.mxu0 0.0
      %566 = vmatprep.subr.mxu0 0.0
      %567 = vmatpush1.msra.mxu0 0.0
      %568 = vmatprep.subr.mxu0 0.0
      %569 = vmatpush1.msra.mxu0 0.0
      %570 = vmatprep.subr.mxu0 0.0
      %571 = vmatpush1.msra.mxu0 0.0
      %572 = vmatprep.subr.mxu0 0.0
      %573 = vmatpush1.msra.mxu0 0.0
      %574 = vmatprep.subr.mxu0 0.0
      %575 = vmatpush1.msra.mxu0 0.0
      %576 = vmatprep.subr.mxu0 0.0
      %577 = vmatpush1.msra.mxu0 0.0
      %578 = vmatprep.subr.mxu0 0.0
      %579 = vmatpush1.msra.mxu0 0.0
      %580 = vmatprep.subr.mxu0 0.0
      %581 = vmatpush1.msra.mxu0 0.0
      %582 = vmatprep.subr.mxu0 0.0
      %583 = vmatpush1.msra.mxu0 0.0
      %584 = vmatprep.subr.mxu0 0.0
      %585 = vmatpush1.msra.mxu0 0.0
      %586 = vmatprep.subr.mxu0 0.0
      %587 = vmatpush1.msra.mxu0 0.0
      %588 = vmatprep.subr.mxu0 0.0
      %589 = vmatpush1.msra.mxu0 0.0
      %590 = vmatprep.subr.mxu0 0.0
      %591 = vmatpush1.msra.mxu0 0.0
      %592 = vmatprep.subr.mxu0 0.0
      %593 = vmatpush1.msra.mxu0 0.0
      %594 = vmatprep.mubr.f32.mxu0 0.0
      %595 = vmatmul.mubr.f32.gmra.mrb[0].mxu0 %v528
      %v596 = vpop.f32.mrb[0].mxu0
      %v597 = vadd.f32 %v525, %v596
      %v598 = vpop.f32.mrb[0].mxu0
      %599 = vdwg.mxu0
      %vm600 = vcmask 516096
      %v601 = vsel %vm600, %v597, 0.0
      %602 = vadd.xlane.f32.xlu0 %v601
      %v603 = vpop.xlane.xlu0 %602
      %v604 = vmul.f32 %v603, %v490
      %v605 = vsub.f32 %v597, %v604
      %v606 = vmul.f32 %v605, %v605
      %v607 = vsel %vm600, %v606, 0.0
      %608 = vadd.xlane.f32.xlu0 %v607
      %v609 = vpop.xlane.xlu0 %608
      %v610 = vmul.f32 %v609, %v490
      %v611 = vadd.f32 %v610, 1e-05
      %v612 = vrsqrt.pop %v611
      %v613 = vmul.f32 %v605, %v612
      %v614 = vxor.u32 %v613, 2147483648
      %v615 = vmul.f32 %v614, 1.442695
      %v616 = vpow.pop %v615
      %v617 = vadd.f32 %v616, 1.0
      %v618 = vrcp.pop %v617
      %v619 = vmul.f32 1.0, %v618
      %620 = vst.msk [vmem:[%s290] sm:$0x1] %vm600, %v619
      %p621 = scmp.lt.s32.totalorder %s20, 1
      %s622 = scalar_select %p621, %s20, 1
      %s623 = scalar_lea.vmem %s7, %s622
      // Predicated region
      $region49: #{attention_block_forward.2} parent=47 // pred_check
        %p624 = pneg %p195
      $region50: #{attention_block_forward.2} parent=47 // pred_check_branch
        %626 = sbr.rel (%p624) target = $region52
      $region51: #{attention_block_forward.2} parent=47 // pred_region
        _
      $region52: #{attention_block_forward.2} parent=47 // pred_fallthru
        _
    $region48: #{attention_block_forward.2} parent=5 // pred_fallthru
      _
    %p627 = scmp.le.s32.totalorder 2, %s15
    // Predicated region
    $region53: #{attention_block_forward.2} parent=5 // pred_check
      %p628 = pneg %p627
    $region54: #{attention_block_forward.2} parent=5 // pred_check_branch
      %630 = sbr.rel (%p628) target = $region56
    $region55: #{attention_block_forward.2} parent=5 // pred_region
      %s631 = ssub.s32 %s15, 2
      // Predicated region
      $region57: #{attention_block_forward.2} parent=55 // pred_check
        %p632 = pneg %p201
      $region58: #{attention_block_forward.2} parent=55 // pred_check_branch
        %634 = sbr.rel (%p632) target = $region60
      $region59: #{attention_block_forward.2} parent=55 // pred_region
        %p635 = scmp.lt.s32.totalorder %s21, 1
        %s636 = scalar_select %p635, %s21, 1
        %s637 = scalar_lea.vmem %s7, %s636
      $region60: #{attention_block_forward.2} parent=55 // pred_fallthru
        _
    $region56: #{attention_block_forward.2} parent=5 // pred_fallthru
      _
  $region6: #{attention_block_forward.2} parent=0 // loop_footer
    %s19 = sadd.s32 1, %s15
  $region7: #{attention_block_forward.2} parent=0 // loop_footer_branch
    %14 = sbr.rel target = $region3
  $region8: #{attention_block_forward.2} parent=0 // loop_exit
    _

// kernel: attention_block_forward.3
$region0: #{attention_block_forward.3}
  #allocation0 [shape = 'u32[]', space=smem, size = 0x4, offset = 0x4, fixed_abs, tag = 'smem constant byte address 0x4 - core index']
  #allocation1 [shape = 'u32[144,128]{1,0:T(1,128)}', space=vmem, size = 0x12000, scoped, tag = 'internal scratch']
  %s0 = inlined_call_operand.vmem [shape: f32[8,4,4], index: 0, kind: input, shape index: {}]
  %s1 = inlined_call_operand.vmem [shape: f32[8,2,4,64], index: 1, kind: input, shape index: {}]
  %s2 = inlined_call_operand.vmem [shape: f32[4,64], index: 2, kind: input, shape index: {}]
  %s3 = inlined_call_operand.vmem [shape: f32[4,16], index: 3, kind: input, shape index: {}]
  %s4 = inlined_call_operand.vmem [shape: f32[8,2,4,64], index: 4, kind: output, shape index: {0}]
  %s5 = inlined_call_operand.vmem [shape: f32[8,2,4,16], index: 5, kind: output, shape index: {1}]
  %6 = xla_tuple %s4, %s5
  %s7 = sld [smem:[#allocation0]]
  $region34: #{attention_block_forward.3} parent=0
    _
  %s9 = ssub.s32 1, %s7
  %s10 = scalar_select 0, %s9, %s7
  // Predicated region
  $region2: #{attention_block_forward.3} parent=0 // pred_check
    _
  $region3: #{attention_block_forward.3} parent=0 // pred_check_branch
    %12 = sbr.rel (0) target = $region5
  $region4: #{attention_block_forward.3} parent=0 // pred_region
    _
  $region5: #{attention_block_forward.3} parent=0 // pred_fallthru
    _
  // Predicated region
  $region6: #{attention_block_forward.3} parent=0 // pred_check
    _
  $region7: #{attention_block_forward.3} parent=0 // pred_check_branch
    %14 = sbr.rel (0) target = $region9
  $region8: #{attention_block_forward.3} parent=0 // pred_region
    _
  $region9: #{attention_block_forward.3} parent=0 // pred_fallthru
    _
  // Predicated region
  $region10: #{attention_block_forward.3} parent=0 // pred_check
    _
  $region11: #{attention_block_forward.3} parent=0 // pred_check_branch
    %16 = sbr.rel (0) target = $region13
  $region12: #{attention_block_forward.3} parent=0 // pred_region
    _
  $region13: #{attention_block_forward.3} parent=0 // pred_fallthru
    _
  // Predicated region
  $region14: #{attention_block_forward.3} parent=0 // pred_check
    _
  $region15: #{attention_block_forward.3} parent=0 // pred_check_branch
    %18 = sbr.rel (0) target = $region17
  $region16: #{attention_block_forward.3} parent=0 // pred_region
    _
  $region17: #{attention_block_forward.3} parent=0 // pred_fallthru
    _
  %v19 = vld [vmem:[%s2] sm:$0xf]
  %v20 = vld [vmem:[%s3] sm:$0xf]
  %v21 = vld [vmem:[%s0] sm:$0xf]
  %vm22 = vcmask 31744
  %v24 = vsel %vm22, %v21, 0
  %vm26 = vcmask 1043456
  %v28 = vsel %vm26, %v19, 0
  %30 = vmatprep.subr.mxu0 0.0
  %31 = vmatpush1.msra.mxu0 %v28
  %32 = vmatprep.subr.mxu0 0.0
  %33 = vmatpush1.msra.mxu0 0.0
  %34 = vmatprep.subr.mxu0 0.0
  %35 = vmatpush1.msra.mxu0 0.0
  %36 = vmatprep.subr.mxu0 0.0
  %37 = vmatpush1.msra.mxu0 0.0
  %38 = vmatprep.subr.mxu0 0.0
  %39 = vmatpush1.msra.mxu0 0.0
  %40 = vmatprep.subr.mxu0 0.0
  %41 = vmatpush1.msra.mxu0 0.0
  %42 = vmatprep.subr.mxu0 0.0
  %43 = vmatpush1.msra.mxu0 0.0
  %44 = vmatprep.subr.mxu0 0.0
  %45 = vmatpush1.msra.mxu0 0.0
  %46 = vmatprep.subr.mxu0 0.0
  %47 = vmatpush1.msra.mxu0 0.0
  %48 = vmatprep.subr.mxu0 0.0
  %49 = vmatpush1.msra.mxu0 0.0
  %50 = vmatprep.subr.mxu0 0.0
  %51 = vmatpush1.msra.mxu0 0.0
  %52 = vmatprep.subr.mxu0 0.0
  %53 = vmatpush1.msra.mxu0 0.0
  %54 = vmatprep.subr.mxu0 0.0
  %55 = vmatpush1.msra.mxu0 0.0
  %56 = vmatprep.subr.mxu0 0.0
  %57 = vmatpush1.msra.mxu0 0.0
  %58 = vmatprep.subr.mxu0 0.0
  %59 = vmatpush1.msra.mxu0 0.0
  %60 = vmatprep.subr.mxu0 0.0
  %61 = vmatpush1.msra.mxu0 0.0
  %62 = vmatprep.subr.mxu0 0.0
  %63 = vmatpush1.msra.mxu0 0.0
  %64 = vmatprep.subr.mxu0 0.0
  %65 = vmatpush1.msra.mxu0 0.0
  %66 = vmatprep.subr.mxu0 0.0
  %67 = vmatpush1.msra.mxu0 0.0
  %68 = vmatprep.subr.mxu0 0.0
  %69 = vmatpush1.msra.mxu0 0.0
  %70 = vmatprep.subr.mxu0 0.0
  %71 = vmatpush1.msra.mxu0 0.0
  %72 = vmatprep.subr.mxu0 0.0
  %73 = vmatpush1.msra.mxu0 0.0
  %74 = vmatprep.subr.mxu0 0.0
  %75 = vmatpush1.msra.mxu0 0.0
  %76 = vmatprep.subr.mxu0 0.0
  %77 = vmatpush1.msra.mxu0 0.0
  %78 = vmatprep.subr.mxu0 0.0
  %79 = vmatpush1.msra.mxu0 0.0
  %80 = vmatprep.subr.mxu0 0.0
  %81 = vmatpush1.msra.mxu0 0.0
  %82 = vmatprep.subr.mxu0 0.0
  %83 = vmatpush1.msra.mxu0 0.0
  %84 = vmatprep.subr.mxu0 0.0
  %85 = vmatpush1.msra.mxu0 0.0
  %86 = vmatprep.subr.mxu0 0.0
  %87 = vmatpush1.msra.mxu0 0.0
  %88 = vmatprep.subr.mxu0 0.0
  %89 = vmatpush1.msra.mxu0 0.0
  %90 = vmatprep.subr.mxu0 0.0
  %91 = vmatpush1.msra.mxu0 0.0
  %92 = vmatprep.subr.mxu0 0.0
  %93 = vmatpush1.msra.mxu0 0.0
  %94 = vmatprep.mubr.f32.mxu0 0.0
  %95 = vmatmul.mubr.f32.gmra.mrb[0].mxu0 %v24
  %v96 = vpop.f32.mrb[0].mxu0
  %v97 = vadd.f32 0.0, %v96
  %v98 = vpop.f32.mrb[0].mxu0
  %99 = vdwg.mxu0
  %v100 = vld [vmem:[%s1] sm:$0xf]
  %v101 = vmul.f32 %v100, %v97
  %vm102 = vcmask 519168
  %103 = vst.msk [vmem:[%s4] sm:$0xf] %vm102, %v101
  %s104 = scalar_lea.vmem %s1, 4
  %v105 = vld [vmem:[%s104] sm:$0xf]
  %v106 = vmul.f32 %v105, %v97
  %s107 = scalar_lea.vmem %s4, 4
  %108 = vst.msk [vmem:[%s107] sm:$0xf] %vm102, %v106
  %v110 = vsel %vm26, %v20, 0
  %112 = vmatprep.subr.mxu0 0.0
  %113 = vmatpush1.msra.mxu0 %v110
  %114 = vmatprep.subr.mxu0 0.0
  %115 = vmatpush1.msra.mxu0 0.0
  %116 = vmatprep.subr.mxu0 0.0
  %117 = vmatpush1.msra.mxu0 0.0
  %118 = vmatprep.subr.mxu0 0.0
  %119 = vmatpush1.msra.mxu0 0.0
  %120 = vmatprep.subr.mxu0 0.0
  %121 = vmatpush1.msra.mxu0 0.0
  %122 = vmatprep.subr.mxu0 0.0
  %123 = vmatpush1.msra.mxu0 0.0
  %124 = vmatprep.subr.mxu0 0.0
  %125 = vmatpush1.msra.mxu0 0.0
  %126 = vmatprep.subr.mxu0 0.0
  %127 = vmatpush1.msra.mxu0 0.0
  %128 = vmatprep.subr.mxu0 0.0
  %129 = vmatpush1.msra.mxu0 0.0
  %130 = vmatprep.subr.mxu0 0.0
  %131 = vmatpush1.msra.mxu0 0.0
  %132 = vmatprep.subr.mxu0 0.0
  %133 = vmatpush1.msra.mxu0 0.0
  %134 = vmatprep.subr.mxu0 0.0
  %135 = vmatpush1.msra.mxu0 0.0
  %136 = vmatprep.subr.mxu0 0.0
  %137 = vmatpush1.msra.mxu0 0.0
  %138 = vmatprep.subr.mxu0 0.0
  %139 = vmatpush1.msra.mxu0 0.0
  %140 = vmatprep.subr.mxu0 0.0
  %141 = vmatpush1.msra.mxu0 0.0
  %142 = vmatprep.subr.mxu0 0.0
  %143 = vmatpush1.msra.mxu0 0.0
  %144 = vmatprep.subr.mxu0 0.0
  %145 = vmatpush1.msra.mxu0 0.0
  %146 = vmatprep.subr.mxu0 0.0
  %147 = vmatpush1.msra.mxu0 0.0
  %148 = vmatprep.subr.mxu0 0.0
  %149 = vmatpush1.msra.mxu0 0.0
  %150 = vmatprep.subr.mxu0 0.0
  %151 = vmatpush1.msra.mxu0 0.0
  %152 = vmatprep.subr.mxu0 0.0
  %153 = vmatpush1.msra.mxu0 0.0
  %154 = vmatprep.subr.mxu0 0.0
  %155 = vmatpush1.msra.mxu0 0.0
  %156 = vmatprep.subr.mxu0 0.0
  %157 = vmatpush1.msra.mxu0 0.0
  %158 = vmatprep.subr.mxu0 0.0
  %159 = vmatpush1.msra.mxu0 0.0
  %160 = vmatprep.subr.mxu0 0.0
  %161 = vmatpush1.msra.mxu0 0.0
  %162 = vmatprep.subr.mxu0 0.0
  %163 = vmatpush1.msra.mxu0 0.0
  %164 = vmatprep.subr.mxu0 0.0
  %165 = vmatpush1.msra.mxu0 0.0
  %166 = vmatprep.subr.mxu0 0.0
  %167 = vmatpush1.msra.mxu0 0.0
  %168 = vmatprep.subr.mxu0 0.0
  %169 = vmatpush1.msra.mxu0 0.0
  %170 = vmatprep.subr.mxu0 0.0
  %171 = vmatpush1.msra.mxu0 0.0
  %172 = vmatprep.subr.mxu0 0.0
  %173 = vmatpush1.msra.mxu0 0.0
  %174 = vmatprep.subr.mxu0 0.0
  %175 = vmatpush1.msra.mxu0 0.0
  %176 = vmatprep.mubr.f32.mxu0 0.0
  %177 = vmatmul.mubr.f32.gmra.mrb[0].mxu0 %v24
  %v178 = vpop.f32.mrb[0].mxu0
  %v179 = vadd.f32 0.0, %v178
  %v180 = vpop.f32.mrb[0].mxu0
  %181 = vdwg.mxu0
  %vm182 = vcmask 125952
  %183 = vst.msk [vmem:[%s5] sm:$0xf] %vm182, %v179
  %s184 = scalar_lea.vmem %s5, 4
  %185 = vst.msk [vmem:[%s184] sm:$0xf] %vm182, %v179
  %s186 = scalar_lea.vmem %s0, 4
  %v187 = vld [vmem:[%s186] sm:$0xf]
  %v189 = vsel %vm22, %v187, 0
  %191 = vmatprep.subr.mxu0 0.0
  %192 = vmatpush1.msra.mxu0 %v28
  %193 = vmatprep.subr.mxu0 0.0
  %194 = vmatpush1.msra.mxu0 0.0
  %195 = vmatprep.subr.mxu0 0.0
  %196 = vmatpush1.msra.mxu0 0.0
  %197 = vmatprep.subr.mxu0 0.0
  %198 = vmatpush1.msra.mxu0 0.0
  %199 = vmatprep.subr.mxu0 0.0
  %200 = vmatpush1.msra.mxu0 0.0
  %201 = vmatprep.subr.mxu0 0.0
  %202 = vmatpush1.msra.mxu0 0.0
  %203 = vmatprep.subr.mxu0 0.0
  %204 = vmatpush1.msra.mxu0 0.0
  %205 = vmatprep.subr.mxu0 0.0
  %206 = vmatpush1.msra.mxu0 0.0
  %207 = vmatprep.subr.mxu0 0.0
  %208 = vmatpush1.msra.mxu0 0.0
  %209 = vmatprep.subr.mxu0 0.0
  %210 = vmatpush1.msra.mxu0 0.0
  %211 = vmatprep.subr.mxu0 0.0
  %212 = vmatpush1.msra.mxu0 0.0
  %213 = vmatprep.subr.mxu0 0.0
  %214 = vmatpush1.msra.mxu0 0.0
  %215 = vmatprep.subr.mxu0 0.0
  %216 = vmatpush1.msra.mxu0 0.0
  %217 = vmatprep.subr.mxu0 0.0
  %218 = vmatpush1.msra.mxu0 0.0
  %219 = vmatprep.subr.mxu0 0.0
  %220 = vmatpush1.msra.mxu0 0.0
  %221 = vmatprep.subr.mxu0 0.0
  %222 = vmatpush1.msra.mxu0 0.0
  %223 = vmatprep.subr.mxu0 0.0
  %224 = vmatpush1.msra.mxu0 0.0
  %225 = vmatprep.subr.mxu0 0.0
  %226 = vmatpush1.msra.mxu0 0.0
  %227 = vmatprep.subr.mxu0 0.0
  %228 = vmatpush1.msra.mxu0 0.0
  %229 = vmatprep.subr.mxu0 0.0
  %230 = vmatpush1.msra.mxu0 0.0
  %231 = vmatprep.subr.mxu0 0.0
  %232 = vmatpush1.msra.mxu0 0.0
  %233 = vmatprep.subr.mxu0 0.0
  %234 = vmatpush1.msra.mxu0 0.0
  %235 = vmatprep.subr.mxu0 0.0
  %236 = vmatpush1.msra.mxu0 0.0
  %237 = vmatprep.subr.mxu0 0.0
  %238 = vmatpush1.msra.mxu0 0.0
  %239 = vmatprep.subr.mxu0 0.0
  %240 = vmatpush1.msra.mxu0 0.0
  %241 = vmatprep.subr.mxu0 0.0
  %242 = vmatpush1.msra.mxu0 0.0
  %243 = vmatprep.subr.mxu0 0.0
  %244 = vmatpush1.msra.mxu0 0.0
  %245 = vmatprep.subr.mxu0 0.0
  %246 = vmatpush1.msra.mxu0 0.0
  %247 = vmatprep.subr.mxu0 0.0
  %248 = vmatpush1.msra.mxu0 0.0
  %249 = vmatprep.subr.mxu0 0.0
  %250 = vmatpush1.msra.mxu0 0.0
  %251 = vmatprep.subr.mxu0 0.0
  %252 = vmatpush1.msra.mxu0 0.0
  %253 = vmatprep.subr.mxu0 0.0
  %254 = vmatpush1.msra.mxu0 0.0
  %255 = vmatprep.mubr.f32.mxu0 0.0
  %256 = vmatmul.mubr.f32.gmra.mrb[0].mxu0 %v189
  %v257 = vpop.f32.mrb[0].mxu0
  %v258 = vadd.f32 0.0, %v257
  %v259 = vpop.f32.mrb[0].mxu0
  %260 = vdwg.mxu0
  %s261 = scalar_lea.vmem %s1, 8
  %v262 = vld [vmem:[%s261] sm:$0xf]
  %v263 = vmul.f32 %v262, %v258
  %s264 = scalar_lea.vmem %s4, 8
  %265 = vst.msk [vmem:[%s264] sm:$0xf] %vm102, %v263
  %s266 = scalar_lea.vmem %s1, 12
  %v267 = vld [vmem:[%s266] sm:$0xf]
  %v268 = vmul.f32 %v267, %v258
  %s269 = scalar_lea.vmem %s4, 12
  %270 = vst.msk [vmem:[%s269] sm:$0xf] %vm102, %v268
  %271 = vmatprep.subr.mxu0 0.0
  %272 = vmatpush1.msra.mxu0 %v110
  %273 = vmatprep.subr.mxu0 0.0
  %274 = vmatpush1.msra.mxu0 0.0
  %275 = vmatprep.subr.mxu0 0.0
  %276 = vmatpush1.msra.mxu0 0.0
  %277 = vmatprep.subr.mxu0 0.0
  %278 = vmatpush1.msra.mxu0 0.0
  %279 = vmatprep.subr.mxu0 0.0
  %280 = vmatpush1.msra.mxu0 0.0
  %281 = vmatprep.subr.mxu0 0.0
  %282 = vmatpush1.msra.mxu0 0.0
  %283 = vmatprep.subr.mxu0 0.0
  %284 = vmatpush1.msra.mxu0 0.0
  %285 = vmatprep.subr.mxu0 0.0
  %286 = vmatpush1.msra.mxu0 0.0
  %287 = vmatprep.subr.mxu0 0.0
  %288 = vmatpush1.msra.mxu0 0.0
  %289 = vmatprep.subr.mxu0 0.0
  %290 = vmatpush1.msra.mxu0 0.0
  %291 = vmatprep.subr.mxu0 0.0
  %292 = vmatpush1.msra.mxu0 0.0
  %293 = vmatprep.subr.mxu0 0.0
  %294 = vmatpush1.msra.mxu0 0.0
  %295 = vmatprep.subr.mxu0 0.0
  %296 = vmatpush1.msra.mxu0 0.0
  %297 = vmatprep.subr.mxu0 0.0
  %298 = vmatpush1.msra.mxu0 0.0
  %299 = vmatprep.subr.mxu0 0.0
  %300 = vmatpush1.msra.mxu0 0.0
  %301 = vmatprep.subr.mxu0 0.0
  %302 = vmatpush1.msra.mxu0 0.0
  %303 = vmatprep.subr.mxu0 0.0
  %304 = vmatpush1.msra.mxu0 0.0
  %305 = vmatprep.subr.mxu0 0.0
  %306 = vmatpush1.msra.mxu0 0.0
  %307 = vmatprep.subr.mxu0 0.0
  %308 = vmatpush1.msra.mxu0 0.0
  %309 = vmatprep.subr.mxu0 0.0
  %310 = vmatpush1.msra.mxu0 0.0
  %311 = vmatprep.subr.mxu0 0.0
  %312 = vmatpush1.msra.mxu0 0.0
  %313 = vmatprep.subr.mxu0 0.0
  %314 = vmatpush1.msra.mxu0 0.0
  %315 = vmatprep.subr.mxu0 0.0
  %316 = vmatpush1.msra.mxu0 0.0
  %317 = vmatprep.subr.mxu0 0.0
  %318 = vmatpush1.msra.mxu0 0.0
  %319 = vmatprep.subr.mxu0 0.0
  %320 = vmatpush1.msra.mxu0 0.0
  %321 = vmatprep.subr.mxu0 0.0
  %322 = vmatpush1.msra.mxu0 0.0
  %323 = vmatprep.subr.mxu0 0.0
  %324 = vmatpush1.msra.mxu0 0.0
  %325 = vmatprep.subr.mxu0 0.0
  %326 = vmatpush1.msra.mxu0 0.0
  %327 = vmatprep.subr.mxu0 0.0
  %328 = vmatpush1.msra.mxu0 0.0
  %329 = vmatprep.subr.mxu0 0.0
  %330 = vmatpush1.msra.mxu0 0.0
  %331 = vmatprep.subr.mxu0 0.0
  %332 = vmatpush1.msra.mxu0 0.0
  %333 = vmatprep.subr.mxu0 0.0
  %334 = vmatpush1.msra.mxu0 0.0
  %335 = vmatprep.mubr.f32.mxu0 0.0
  %336 = vmatmul.mubr.f32.gmra.mrb[0].mxu0 %v189
  %v337 = vpop.f32.mrb[0].mxu0
  %v338 = vadd.f32 0.0, %v337
  %v339 = vpop.f32.mrb[0].mxu0
  %340 = vdwg.mxu0
  %s341 = scalar_lea.vmem %s5, 8
  %342 = vst.msk [vmem:[%s341] sm:$0xf] %vm182, %v338
  %s343 = scalar_lea.vmem %s5, 12
  %344 = vst.msk [vmem:[%s343] sm:$0xf] %vm182, %v338
  %s345 = scalar_lea.vmem %s0, 8
  %v346 = vld [vmem:[%s345] sm:$0xf]
  %v348 = vsel %vm22, %v346, 0
  %350 = vmatprep.subr.mxu0 0.0
  %351 = vmatpush1.msra.mxu0 %v28
  %352 = vmatprep.subr.mxu0 0.0
  %353 = vmatpush1.msra.mxu0 0.0
  %354 = vmatprep.subr.mxu0 0.0
  %355 = vmatpush1.msra.mxu0 0.0
  %356 = vmatprep.subr.mxu0 0.0
  %357 = vmatpush1.msra.mxu0 0.0
  %358 = vmatprep.subr.mxu0 0.0
  %359 = vmatpush1.msra.mxu0 0.0
  %360 = vmatprep.subr.mxu0 0.0
  %361 = vmatpush1.msra.mxu0 0.0
  %362 = vmatprep.subr.mxu0 0.0
  %363 = vmatpush1.msra.mxu0 0.0
  %364 = vmatprep.subr.mxu0 0.0
  %365 = vmatpush1.msra.mxu0 0.0
  %366 = vmatprep.subr.mxu0 0.0
  %367 = vmatpush1.msra.mxu0 0.0
  %368 = vmatprep.subr.mxu0 0.0
  %369 = vmatpush1.msra.mxu0 0.0
  %370 = vmatprep.subr.mxu0 0.0
  %371 = vmatpush1.msra.mxu0 0.0
  %372 = vmatprep.subr.mxu0 0.0
  %373 = vmatpush1.msra.mxu0 0.0
  %374 = vmatprep.subr.mxu0 0.0
  %375 = vmatpush1.msra.mxu0 0.0
  %376 = vmatprep.subr.mxu0 0.0
  %377 = vmatpush1.msra.mxu0 0.0
  %378 = vmatprep.subr.mxu0 0.0
  %379 = vmatpush1.msra.mxu0 0.0
  %380 = vmatprep.subr.mxu0 0.0
  %381 = vmatpush1.msra.mxu0 0.0
  %382 = vmatprep.subr.mxu0 0.0
  %383 = vmatpush1.msra.mxu0 0.0
  %384 = vmatprep.subr.mxu0 0.0
  %385 = vmatpush1.msra.mxu0 0.0
  %386 = vmatprep.subr.mxu0 0.0
  %387 = vmatpush1.msra.mxu0 0.0
  %388 = vmatprep.subr.mxu0 0.0
  %389 = vmatpush1.msra.mxu0 0.0
  %390 = vmatprep.subr.mxu0 0.0
  %391 = vmatpush1.msra.mxu0 0.0
  %392 = vmatprep.subr.mxu0 0.0
  %393 = vmatpush1.msra.mxu0 0.0
  %394 = vmatprep.subr.mxu0 0.0
  %395 = vmatpush1.msra.mxu0 0.0
  %396 = vmatprep.subr.mxu0 0.0
  %397 = vmatpush1.msra.mxu0 0.0
  %398 = vmatprep.subr.mxu0 0.0
  %399 = vmatpush1.msra.mxu0 0.0
  %400 = vmatprep.subr.mxu0 0.0
  %401 = vmatpush1.msra.mxu0 0.0
  %402 = vmatprep.subr.mxu0 0.0
  %403 = vmatpush1.msra.mxu0 0.0
  %404 = vmatprep.subr.mxu0 0.0
  %405 = vmatpush1.msra.mxu0 0.0
  %406 = vmatprep.subr.mxu0 0.0
  %407 = vmatpush1.msra.mxu0 0.0
  %408 = vmatprep.subr.mxu0 0.0
  %409 = vmatpush1.msra.mxu0 0.0
  %410 = vmatprep.subr.mxu0 0.0
  %411 = vmatpush1.msra.mxu0 0.0
  %412 = vmatprep.subr.mxu0 0.0
  %413 = vmatpush1.msra.mxu0 0.0
  %414 = vmatprep.mubr.f32.mxu0 0.0
  %415 = vmatmul.mubr.f32.gmra.mrb[0].mxu0 %v348
  %v416 = vpop.f32.mrb[0].mxu0
  %v417 = vadd.f32 0.0, %v416
  %v418 = vpop.f32.mrb[0].mxu0
  %419 = vdwg.mxu0
  %s420 = scalar_lea.vmem %s1, 16
  %v421 = vld [vmem:[%s420] sm:$0xf]
  %v422 = vmul.f32 %v421, %v417
  %s423 = scalar_lea.vmem %s4, 16
  %424 = vst.msk [vmem:[%s423] sm:$0xf] %vm102, %v422
  %s425 = scalar_lea.vmem %s1, 20
  %v426 = vld [vmem:[%s425] sm:$0xf]
  %v427 = vmul.f32 %v426, %v417
  %s428 = scalar_lea.vmem %s4, 20
  %429 = vst.msk [vmem:[%s428] sm:$0xf] %vm102, %v427
  %430 = vmatprep.subr.mxu0 0.0
  %431 = vmatpush1.msra.mxu0 %v110
  %432 = vmatprep.subr.mxu0 0.0
  %433 = vmatpush1.msra.mxu0 0.0
  %434 = vmatprep.subr.mxu0 0.0
  %435 = vmatpush1.msra.mxu0 0.0
  %436 = vmatprep.subr.mxu0 0.0
  %437 = vmatpush1.msra.mxu0 0.0
  %438 = vmatprep.subr.mxu0 0.0
  %439 = vmatpush1.msra.mxu0 0.0
  %440 = vmatprep.subr.mxu0 0.0
  %441 = vmatpush1.msra.mxu0 0.0
  %442 = vmatprep.subr.mxu0 0.0
  %443 = vmatpush1.msra.mxu0 0.0
  %444 = vmatprep.subr.mxu0 0.0
  %445 = vmatpush1.msra.mxu0 0.0
  %446 = vmatprep.subr.mxu0 0.0
  %447 = vmatpush1.msra.mxu0 0.0
  %448 = vmatprep.subr.mxu0 0.0
  %449 = vmatpush1.msra.mxu0 0.0
  %450 = vmatprep.subr.mxu0 0.0
  %451 = vmatpush1.msra.mxu0 0.0
  %452 = vmatprep.subr.mxu0 0.0
  %453 = vmatpush1.msra.mxu0 0.0
  %454 = vmatprep.subr.mxu0 0.0
  %455 = vmatpush1.msra.mxu0 0.0
  %456 = vmatprep.subr.mxu0 0.0
  %457 = vmatpush1.msra.mxu0 0.0
  %458 = vmatprep.subr.mxu0 0.0
  %459 = vmatpush1.msra.mxu0 0.0
  %460 = vmatprep.subr.mxu0 0.0
  %461 = vmatpush1.msra.mxu0 0.0
  %462 = vmatprep.subr.mxu0 0.0
  %463 = vmatpush1.msra.mxu0 0.0
  %464 = vmatprep.subr.mxu0 0.0
  %465 = vmatpush1.msra.mxu0 0.0
  %466 = vmatprep.subr.mxu0 0.0
  %467 = vmatpush1.msra.mxu0 0.0
  %468 = vmatprep.subr.mxu0 0.0
  %469 = vmatpush1.msra.mxu0 0.0
  %470 = vmatprep.subr.mxu0 0.0
  %471 = vmatpush1.msra.mxu0 0.0
  %472 = vmatprep.subr.mxu0 0.0
  %473 = vmatpush1.msra.mxu0 0.0
  %474 = vmatprep.subr.mxu0 0.0
  %475 = vmatpush1.msra.mxu0 0.0
  %476 = vmatprep.subr.mxu0 0.0
  %477 = vmatpush1.msra.mxu0 0.0
  %478 = vmatprep.subr.mxu0 0.0
  %479 = vmatpush1.msra.mxu0 0.0
  %480 = vmatprep.subr.mxu0 0.0
  %481 = vmatpush1.msra.mxu0 0.0
  %482 = vmatprep.subr.mxu0 0.0
  %483 = vmatpush1.msra.mxu0 0.0
  %484 = vmatprep.subr.mxu0 0.0
  %485 = vmatpush1.msra.mxu0 0.0
  %486 = vmatprep.subr.mxu0 0.0
  %487 = vmatpush1.msra.mxu0 0.0
  %488 = vmatprep.subr.mxu0 0.0
  %489 = vmatpush1.msra.mxu0 0.0
  %490 = vmatprep.subr.mxu0 0.0
  %491 = vmatpush1.msra.mxu0 0.0
  %492 = vmatprep.subr.mxu0 0.0
  %493 = vmatpush1.msra.mxu0 0.0
  %494 = vmatprep.mubr.f32.mxu0 0.0
  %495 = vmatmul.mubr.f32.gmra.mrb[0].mxu0 %v348
  %v496 = vpop.f32.mrb[0].mxu0
  %v497 = vadd.f32 0.0, %v496
  %v498 = vpop.f32.mrb[0].mxu0
  %499 = vdwg.mxu0
  %s500 = scalar_lea.vmem %s5, 16
  %501 = vst.msk [vmem:[%s500] sm:$0xf] %vm182, %v497
  %s502 = scalar_lea.vmem %s5, 20
  %503 = vst.msk [vmem:[%s502] sm:$0xf] %vm182, %v497
  %s504 = scalar_lea.vmem %s0, 12
  %v505 = vld [vmem:[%s504] sm:$0xf]
  %v507 = vsel %vm22, %v505, 0
  %509 = vmatprep.subr.mxu0 0.0
  %510 = vmatpush1.msra.mxu0 %v28
  %511 = vmatprep.subr.mxu0 0.0
  %512 = vmatpush1.msra.mxu0 0.0
  %513 = vmatprep.subr.mxu0 0.0
  %514 = vmatpush1.msra.mxu0 0.0
  %515 = vmatprep.subr.mxu0 0.0
  %516 = vmatpush1.msra.mxu0 0.0
  %517 = vmatprep.subr.mxu0 0.0
  %518 = vmatpush1.msra.mxu0 0.0
  %519 = vmatprep.subr.mxu0 0.0
  %520 = vmatpush1.msra.mxu0 0.0
  %521 = vmatprep.subr.mxu0 0.0
  %522 = vmatpush1.msra.mxu0 0.0
  %523 = vmatprep.subr.mxu0 0.0
  %524 = vmatpush1.msra.mxu0 0.0
  %525 = vmatprep.subr.mxu0 0.0
  %526 = vmatpush1.msra.mxu0 0.0
  %527 = vmatprep.subr.mxu0 0.0
  %528 = vmatpush1.msra.mxu0 0.0
  %529 = vmatprep.subr.mxu0 0.0
  %530 = vmatpush1.msra.mxu0 0.0
  %531 = vmatprep.subr.mxu0 0.0
  %532 = vmatpush1.msra.mxu0 0.0
  %533 = vmatprep.subr.mxu0 0.0
  %534 = vmatpush1.msra.mxu0 0.0
  %535 = vmatprep.subr.mxu0 0.0
  %536 = vmatpush1.msra.mxu0 0.0
  %537 = vmatprep.subr.mxu0 0.0
  %538 = vmatpush1.msra.mxu0 0.0
  %539 = vmatprep.subr.mxu0 0.0
  %540 = vmatpush1.msra.mxu0 0.0
  %541 = vmatprep.subr.mxu0 0.0
  %542 = vmatpush1.msra.mxu0 0.0
  %543 = vmatprep.subr.mxu0 0.0
  %544 = vmatpush1.msra.mxu0 0.0
  %545 = vmatprep.subr.mxu0 0.0
  %546 = vmatpush1.msra.mxu0 0.0
  %547 = vmatprep.subr.mxu0 0.0
  %548 = vmatpush1.msra.mxu0 0.0
  %549 = vmatprep.subr.mxu0 0.0
  %550 = vmatpush1.msra.mxu0 0.0
  %551 = vmatprep.subr.mxu0 0.0
  %552 = vmatpush1.msra.mxu0 0.0
  %553 = vmatprep.subr.mxu0 0.0
  %554 = vmatpush1.msra.mxu0 0.0
  %555 = vmatprep.subr.mxu0 0.0
  %556 = vmatpush1.msra.mxu0 0.0
  %557 = vmatprep.subr.mxu0 0.0
  %558 = vmatpush1.msra.mxu0 0.0
  %559 = vmatprep.subr.mxu0 0.0
  %560 = vmatpush1.msra.mxu0 0.0
  %561 = vmatprep.subr.mxu0 0.0
  %562 = vmatpush1.msra.mxu0 0.0
  %563 = vmatprep.subr.mxu0 0.0
  %564 = vmatpush1.msra.mxu0 0.0
  %565 = vmatprep.subr.mxu0 0.0
  %566 = vmatpush1.msra.mxu0 0.0
  %567 = vmatprep.subr.mxu0 0.0
  %568 = vmatpush1.msra.mxu0 0.0
  %569 = vmatprep.subr.mxu0 0.0
  %570 = vmatpush1.msra.mxu0 0.0
  %571 = vmatprep.subr.mxu0 0.0
  %572 = vmatpush1.msra.mxu0 0.0
  %573 = vmatprep.mubr.f32.mxu0 0.0
  %574 = vmatmul.mubr.f32.gmra.mrb[0].mxu0 %v507
  %v575 = vpop.f32.mrb[0].mxu0
  %v576 = vadd.f32 0.0, %v575
  %v577 = vpop.f32.mrb[0].mxu0
  %578 = vdwg.mxu0
  %s579 = scalar_lea.vmem %s1, 24
  %v580 = vld [vmem:[%s579] sm:$0xf]
  %v581 = vmul.f32 %v580, %v576
  %s582 = scalar_lea.vmem %s4, 24
  %583 = vst.msk [vmem:[%s582] sm:$0xf] %vm102, %v581
  %s584 = scalar_lea.vmem %s1, 28
  %v585 = vld [vmem:[%s584] sm:$0xf]
  %v586 = vmul.f32 %v585, %v576
  %s587 = scalar_lea.vmem %s4, 28
  %588 = vst.msk [vmem:[%s587] sm:$0xf] %vm102, %v586
  %589 = vmatprep.subr.mxu0 0.0
  %590 = vmatpush1.msra.mxu0 %v110
  %591 = vmatprep.subr.mxu0 0.0
  %592 = vmatpush1.msra.mxu0 0.0
  %593 = vmatprep.subr.mxu0 0.0
  %594 = vmatpush1.msra.mxu0 0.0
  %595 = vmatprep.subr.mxu0 0.0
  %596 = vmatpush1.msra.mxu0 0.0
  %597 = vmatprep.subr.mxu0 0.0
  %598 = vmatpush1.msra.mxu0 0.0
  %599 = vmatprep.subr.mxu0 0.0
  %600 = vmatpush1.msra.mxu0 0.0
  %601 = vmatprep.subr.mxu0 0.0
  %602 = vmatpush1.msra.mxu0 0.0
  %603 = vmatprep.subr.mxu0 0.0
  %604 = vmatpush1.msra.mxu0 0.0
  %605 = vmatprep.subr.mxu0 0.0
  %606 = vmatpush1.msra.mxu0 0.0
  %607 = vmatprep.subr.mxu0 0.0
  %608 = vmatpush1.msra.mxu0 0.0
  %609 = vmatprep.subr.mxu0 0.0
  %610 = vmatpush1.msra.mxu0 0.0
  %611 = vmatprep.subr.mxu0 0.0
  %612 = vmatpush1.msra.mxu0 0.0
  %613 = vmatprep.subr.mxu0 0.0
  %614 = vmatpush1.msra.mxu0 0.0
  %615 = vmatprep.subr.mxu0 0.0
  %616 = vmatpush1.msra.mxu0 0.0
  %617 = vmatprep.subr.mxu0 0.0
  %618 = vmatpush1.msra.mxu0 0.0
  %619 = vmatprep.subr.mxu0 0.0
  %620 = vmatpush1.msra.mxu0 0.0
  %621 = vmatprep.subr.mxu0 0.0
  %622 = vmatpush1.msra.mxu0 0.0
  %623 = vmatprep.subr.mxu0 0.0
  %624 = vmatpush1.msra.mxu0 0.0
  %625 = vmatprep.subr.mxu0 0.0
  %626 = vmatpush1.msra.mxu0 0.0
  %627 = vmatprep.subr.mxu0 0.0
  %628 = vmatpush1.msra.mxu0 0.0
  %629 = vmatprep.subr.mxu0 0.0
  %630 = vmatpush1.msra.mxu0 0.0
  %631 = vmatprep.subr.mxu0 0.0
  %632 = vmatpush1.msra.mxu0 0.0
  %633 = vmatprep.subr.mxu0 0.0
  %634 = vmatpush1.msra.mxu0 0.0
  %635 = vmatprep.subr.mxu0 0.0
  %636 = vmatpush1.msra.mxu0 0.0
  %637 = vmatprep.subr.mxu0 0.0
  %638 = vmatpush1.msra.mxu0 0.0
  %639 = vmatprep.subr.mxu0 0.0
  %640 = vmatpush1.msra.mxu0 0.0
  %641 = vmatprep.subr.mxu0 0.0
  %642 = vmatpush1.msra.mxu0 0.0
  %643 = vmatprep.subr.mxu0 0.0
  %644 = vmatpush1.msra.mxu0 0.0
  %645 = vmatprep.subr.mxu0 0.0
  %646 = vmatpush1.msra.mxu0 0.0
  %647 = vmatprep.subr.mxu0 0.0
  %648 = vmatpush1.msra.mxu0 0.0
  %649 = vmatprep.subr.mxu0 0.0
  %650 = vmatpush1.msra.mxu0 0.0
  %651 = vmatprep.subr.mxu0 0.0
  %652 = vmatpush1.msra.mxu0 0.0
  %653 = vmatprep.mubr.f32.mxu0 0.0
  %654 = vmatmul.mubr.f32.gmra.mrb[0].mxu0 %v507
  %v655 = vpop.f32.mrb[0].mxu0
  %v656 = vadd.f32 0.0, %v655
  %v657 = vpop.f32.mrb[0].mxu0
  %658 = vdwg.mxu0
  %s659 = scalar_lea.vmem %s5, 24
  %660 = vst.msk [vmem:[%s659] sm:$0xf] %vm182, %v656
  %s661 = scalar_lea.vmem %s5, 28
  %662 = vst.msk [vmem:[%s661] sm:$0xf] %vm182, %v656
  %s663 = scalar_lea.vmem %s0, 16
  %v664 = vld [vmem:[%s663] sm:$0xf]
  %v666 = vsel %vm22, %v664, 0
  %668 = vmatprep.subr.mxu0 0.0
  %669 = vmatpush1.msra.mxu0 %v28
  %670 = vmatprep.subr.mxu0 0.0
  %671 = vmatpush1.msra.mxu0 0.0
  %672 = vmatprep.subr.mxu0 0.0
  %673 = vmatpush1.msra.mxu0 0.0
  %674 = vmatprep.subr.mxu0 0.0
  %675 = vmatpush1.msra.mxu0 0.0
  %676 = vmatprep.subr.mxu0 0.0
  %677 = vmatpush1.msra.mxu0 0.0
  %678 = vmatprep.subr.mxu0 0.0
  %679 = vmatpush1.msra.mxu0 0.0
  %680 = vmatprep.subr.mxu0 0.0
  %681 = vmatpush1.msra.mxu0 0.0
  %682 = vmatprep.subr.mxu0 0.0
  %683 = vmatpush1.msra.mxu0 0.0
  %684 = vmatprep.subr.mxu0 0.0
  %685 = vmatpush1.msra.mxu0 0.0
  %686 = vmatprep.subr.mxu0 0.0
  %687 = vmatpush1.msra.mxu0 0.0
  %688 = vmatprep.subr.mxu0 0.0
  %689 = vmatpush1.msra.mxu0 0.0
  %690 = vmatprep.subr.mxu0 0.0
  %691 = vmatpush1.msra.mxu0 0.0
  %692 = vmatprep.subr.mxu0 0.0
  %693 = vmatpush1.msra.mxu0 0.0
  %694 = vmatprep.subr.mxu0 0.0
  %695 = vmatpush1.msra.mxu0 0.0
  %696 = vmatprep.subr.mxu0 0.0
  %697 = vmatpush1.msra.mxu0 0.0
  %698 = vmatprep.subr.mxu0 0.0
  %699 = vmatpush1.msra.mxu0 0.0
  %700 = vmatprep.subr.mxu0 0.0
  %701 = vmatpush1.msra.mxu0 0.0
  %702 = vmatprep.subr.mxu0 0.0
  %703 = vmatpush1.msra.mxu0 0.0
  %704 = vmatprep.subr.mxu0 0.0
  %705 = vmatpush1.msra.mxu0 0.0
  %706 = vmatprep.subr.mxu0 0.0
  %707 = vmatpush1.msra.mxu0 0.0
  %708 = vmatprep.subr.mxu0 0.0
  %709 = vmatpush1.msra.mxu0 0.0
  %710 = vmatprep.subr.mxu0 0.0
  %711 = vmatpush1.msra.mxu0 0.0
  %712 = vmatprep.subr.mxu0 0.0
  %713 = vmatpush1.msra.mxu0 0.0
  %714 = vmatprep.subr.mxu0 0.0
  %715 = vmatpush1.msra.mxu0 0.0
  %716 = vmatprep.subr.mxu0 0.0
  %717 = vmatpush1.msra.mxu0 0.0
  %718 = vmatprep.subr.mxu0 0.0
  %719 = vmatpush1.msra.mxu0 0.0
  %720 = vmatprep.subr.mxu0 0.0
  %721 = vmatpush1.msra.mxu0 0.0
  %722 = vmatprep.subr.mxu0 0.0
  %723 = vmatpush1.msra.mxu0 0.0
  %724 = vmatprep.subr.mxu0 0.0
  %725 = vmatpush1.msra.mxu0 0.0
  %726 = vmatprep.subr.mxu0 0.0
  %727 = vmatpush1.msra.mxu0 0.0
  %728 = vmatprep.subr.mxu0 0.0
  %729 = vmatpush1.msra.mxu0 0.0
  %730 = vmatprep.subr.mxu0 0.0
  %731 = vmatpush1.msra.mxu0 0.0
  %732 = vmatprep.mubr.f32.mxu0 0.0
  %733 = vmatmul.mubr.f32.gmra.mrb[0].mxu0 %v666
  %v734 = vpop.f32.mrb[0].mxu0
  %v735 = vadd.f32 0.0, %v734
  %v736 = vpop.f32.mrb[0].mxu0
  %737 = vdwg.mxu0
  %s738 = scalar_lea.vmem %s1, 32
  %v739 = vld [vmem:[%s738] sm:$0xf]
  %v740 = vmul.f32 %v739, %v735
  %s741 = scalar_lea.vmem %s4, 32
  %742 = vst.msk [vmem:[%s741] sm:$0xf] %vm102, %v740
  %s743 = scalar_lea.vmem %s1, 36
  %v744 = vld [vmem:[%s743] sm:$0xf]
  %v745 = vmul.f32 %v744, %v735
  %s746 = scalar_lea.vmem %s4, 36
  %747 = vst.msk [vmem:[%s746] sm:$0xf] %vm102, %v745
  %748 = vmatprep.subr.mxu0 0.0
  %749 = vmatpush1.msra.mxu0 %v110
  %750 = vmatprep.subr.mxu0 0.0
  %751 = vmatpush1.msra.mxu0 0.0
  %752 = vmatprep.subr.mxu0 0.0
  %753 = vmatpush1.msra.mxu0 0.0
  %754 = vmatprep.subr.mxu0 0.0
  %755 = vmatpush1.msra.mxu0 0.0
  %756 = vmatprep.subr.mxu0 0.0
  %757 = vmatpush1.msra.mxu0 0.0
  %758 = vmatprep.subr.mxu0 0.0
  %759 = vmatpush1.msra.mxu0 0.0
  %760 = vmatprep.subr.mxu0 0.0
  %761 = vmatpush1.msra.mxu0 0.0
  %762 = vmatprep.subr.mxu0 0.0
  %763 = vmatpush1.msra.mxu0 0.0
  %764 = vmatprep.subr.mxu0 0.0
  %765 = vmatpush1.msra.mxu0 0.0
  %766 = vmatprep.subr.mxu0 0.0
  %767 = vmatpush1.msra.mxu0 0.0
  %768 = vmatprep.subr.mxu0 0.0
  %769 = vmatpush1.msra.mxu0 0.0
  %770 = vmatprep.subr.mxu0 0.0
  %771 = vmatpush1.msra.mxu0 0.0
  %772 = vmatprep.subr.mxu0 0.0
  %773 = vmatpush1.msra.mxu0 0.0
  %774 = vmatprep.subr.mxu0 0.0
  %775 = vmatpush1.msra.mxu0 0.0
  %776 = vmatprep.subr.mxu0 0.0
  %777 = vmatpush1.msra.mxu0 0.0
  %778 = vmatprep.subr.mxu0 0.0
  %779 = vmatpush1.msra.mxu0 0.0
  %780 = vmatprep.subr.mxu0 0.0
  %781 = vmatpush1.msra.mxu0 0.0
  %782 = vmatprep.subr.mxu0 0.0
  %783 = vmatpush1.msra.mxu0 0.0
  %784 = vmatprep.subr.mxu0 0.0
  %785 = vmatpush1.msra.mxu0 0.0
  %786 = vmatprep.subr.mxu0 0.0
  %787 = vmatpush1.msra.mxu0 0.0
  %788 = vmatprep.subr.mxu0 0.0
  %789 = vmatpush1.msra.mxu0 0.0
  %790 = vmatprep.subr.mxu0 0.0
  %791 = vmatpush1.msra.mxu0 0.0
  %792 = vmatprep.subr.mxu0 0.0
  %793 = vmatpush1.msra.mxu0 0.0
  %794 = vmatprep.subr.mxu0 0.0
  %795 = vmatpush1.msra.mxu0 0.0
  %796 = vmatprep.subr.mxu0 0.0
  %797 = vmatpush1.msra.mxu0 0.0
  %798 = vmatprep.subr.mxu0 0.0
  %799 = vmatpush1.msra.mxu0 0.0
  %800 = vmatprep.subr.mxu0 0.0
  %801 = vmatpush1.msra.mxu0 0.0
  %802 = vmatprep.subr.mxu0 0.0
  %803 = vmatpush1.msra.mxu0 0.0
  %804 = vmatprep.subr.mxu0 0.0
  %805 = vmatpush1.msra.mxu0 0.0
  %806 = vmatprep.subr.mxu0 0.0
  %807 = vmatpush1.msra.mxu0 0.0
  %808 = vmatprep.subr.mxu0 0.0
  %809 = vmatpush1.msra.mxu0 0.0
  %810 = vmatprep.subr.mxu0 0.0
  %811 = vmatpush1.msra.mxu0 0.0
  %812 = vmatprep.mubr.f32.mxu0 0.0
  %813 = vmatmul.mubr.f32.gmra.mrb[0].mxu0 %v666
  %v814 = vpop.f32.mrb[0].mxu0
  %v815 = vadd.f32 0.0, %v814
  %v816 = vpop.f32.mrb[0].mxu0
  %817 = vdwg.mxu0
  %s818 = scalar_lea.vmem %s5, 32
  %819 = vst.msk [vmem:[%s818] sm:$0xf] %vm182, %v815
  %s820 = scalar_lea.vmem %s5, 36
  %821 = vst.msk [vmem:[%s820] sm:$0xf] %vm182, %v815
  %s822 = scalar_lea.vmem %s0, 20
  %v823 = vld [vmem:[%s822] sm:$0xf]
  %v825 = vsel %vm22, %v823, 0
  %827 = vmatprep.subr.mxu0 0.0
  %828 = vmatpush1.msra.mxu0 %v28
  %829 = vmatprep.subr.mxu0 0.0
  %830 = vmatpush1.msra.mxu0 0.0
  %831 = vmatprep.subr.mxu0 0.0
  %832 = vmatpush1.msra.mxu0 0.0
  %833 = vmatprep.subr.mxu0 0.0
  %834 = vmatpush1.msra.mxu0 0.0
  %835 = vmatprep.subr.mxu0 0.0
  %836 = vmatpush1.msra.mxu0 0.0
  %837 = vmatprep.subr.mxu0 0.0
  %838 = vmatpush1.msra.mxu0 0.0
  %839 = vmatprep.subr.mxu0 0.0
  %840 = vmatpush1.msra.mxu0 0.0
  %841 = vmatprep.subr.mxu0 0.0
  %842 = vmatpush1.msra.mxu0 0.0
  %843 = vmatprep.subr.mxu0 0.0
  %844 = vmatpush1.msra.mxu0 0.0
  %845 = vmatprep.subr.mxu0 0.0
  %846 = vmatpush1.msra.mxu0 0.0
  %847 = vmatprep.subr.mxu0 0.0
  %848 = vmatpush1.msra.mxu0 0.0
  %849 = vmatprep.subr.mxu0 0.0
  %850 = vmatpush1.msra.mxu0 0.0
  %851 = vmatprep.subr.mxu0 0.0
  %852 = vmatpush1.msra.mxu0 0.0
  %853 = vmatprep.subr.mxu0 0.0
  %854 = vmatpush1.msra.mxu0 0.0
  %855 = vmatprep.subr.mxu0 0.0
  %856 = vmatpush1.msra.mxu0 0.0
  %857 = vmatprep.subr.mxu0 0.0
  %858 = vmatpush1.msra.mxu0 0.0
  %859 = vmatprep.subr.mxu0 0.0
  %860 = vmatpush1.msra.mxu0 0.0
  %861 = vmatprep.subr.mxu0 0.0
  %862 = vmatpush1.msra.mxu0 0.0
  %863 = vmatprep.subr.mxu0 0.0
  %864 = vmatpush1.msra.mxu0 0.0
  %865 = vmatprep.subr.mxu0 0.0
  %866 = vmatpush1.msra.mxu0 0.0
  %867 = vmatprep.subr.mxu0 0.0
  %868 = vmatpush1.msra.mxu0 0.0
  %869 = vmatprep.subr.mxu0 0.0
  %870 = vmatpush1.msra.mxu0 0.0
  %871 = vmatprep.subr.mxu0 0.0
  %872 = vmatpush1.msra.mxu0 0.0
  %873 = vmatprep.subr.mxu0 0.0
  %874 = vmatpush1.msra.mxu0 0.0
  %875 = vmatprep.subr.mxu0 0.0
  %876 = vmatpush1.msra.mxu0 0.0
  %877 = vmatprep.subr.mxu0 0.0
  %878 = vmatpush1.msra.mxu0 0.0
  %879 = vmatprep.subr.mxu0 0.0
  %880 = vmatpush1.msra.mxu0 0.0
  %881 = vmatprep.subr.mxu0 0.0
  %882 = vmatpush1.msra.mxu0 0.0
  %883 = vmatprep.subr.mxu0 0.0
  %884 = vmatpush1.msra.mxu0 0.0
  %885 = vmatprep.subr.mxu0 0.0
  %886 = vmatpush1.msra.mxu0 0.0
  %887 = vmatprep.subr.mxu0 0.0
  %888 = vmatpush1.msra.mxu0 0.0
  %889 = vmatprep.subr.mxu0 0.0
  %890 = vmatpush1.msra.mxu0 0.0
  %891 = vmatprep.mubr.f32.mxu0 0.0
  %892 = vmatmul.mubr.f32.gmra.mrb[0].mxu0 %v825
  %v893 = vpop.f32.mrb[0].mxu0
  %v894 = vadd.f32 0.0, %v893
  %v895 = vpop.f32.mrb[0].mxu0
  %896 = vdwg.mxu0
  %s897 = scalar_lea.vmem %s1, 40
  %v898 = vld [vmem:[%s897] sm:$0xf]
  %v899 = vmul.f32 %v898, %v894
  %s900 = scalar_lea.vmem %s4, 40
  %901 = vst.msk [vmem:[%s900] sm:$0xf] %vm102, %v899
  %s902 = scalar_lea.vmem %s1, 44
  %v903 = vld [vmem:[%s902] sm:$0xf]
  %v904 = vmul.f32 %v903, %v894
  %s905 = scalar_lea.vmem %s4, 44
  %906 = vst.msk [vmem:[%s905] sm:$0xf] %vm102, %v904
  %907 = vmatprep.subr.mxu0 0.0
  %908 = vmatpush1.msra.mxu0 %v110
  %909 = vmatprep.subr.mxu0 0.0
  %910 = vmatpush1.msra.mxu0 0.0
  %911 = vmatprep.subr.mxu0 0.0
  %912 = vmatpush1.msra.mxu0 0.0
  %913 = vmatprep.subr.mxu0 0.0
  %914 = vmatpush1.msra.mxu0 0.0
  %915 = vmatprep.subr.mxu0 0.0
  %916 = vmatpush1.msra.mxu0 0.0
  %917 = vmatprep.subr.mxu0 0.0
  %918 = vmatpush1.msra.mxu0 0.0
  %919 = vmatprep.subr.mxu0 0.0
  %920 = vmatpush1.msra.mxu0 0.0
  %921 = vmatprep.subr.mxu0 0.0
  %922 = vmatpush1.msra.mxu0 0.0
  %923 = vmatprep.subr.mxu0 0.0
  %924 = vmatpush1.msra.mxu0 0.0
  %925 = vmatprep.subr.mxu0 0.0
  %926 = vmatpush1.msra.mxu0 0.0
  %927 = vmatprep.subr.mxu0 0.0
  %928 = vmatpush1.msra.mxu0 0.0
  %929 = vmatprep.subr.mxu0 0.0
  %930 = vmatpush1.msra.mxu0 0.0
  %931 = vmatprep.subr.mxu0 0.0
  %932 = vmatpush1.msra.mxu0 0.0
  %933 = vmatprep.subr.mxu0 0.0
  %934 = vmatpush1.msra.mxu0 0.0
  %935 = vmatprep.subr.mxu0 0.0
  %936 = vmatpush1.msra.mxu0 0.0
  %937 = vmatprep.subr.mxu0 0.0
  %938 = vmatpush1.msra.mxu0 0.0
  %939 = vmatprep.subr.mxu0 0.0
  %940 = vmatpush1.msra.mxu0 0.0
  %941 = vmatprep.subr.mxu0 0.0
  %942 = vmatpush1.msra.mxu0 0.0
  %943 = vmatprep.subr.mxu0 0.0
  %944 = vmatpush1.msra.mxu0 0.0
  %945 = vmatprep.subr.mxu0 0.0
  %946 = vmatpush1.msra.mxu0 0.0
  %947 = vmatprep.subr.mxu0 0.0
  %948 = vmatpush1.msra.mxu0 0.0
  %949 = vmatprep.subr.mxu0 0.0
  %950 = vmatpush1.msra.mxu0 0.0
  %951 = vmatprep.subr.mxu0 0.0
  %952 = vmatpush1.msra.mxu0 0.0
  %953 = vmatprep.subr.mxu0 0.0
  %954 = vmatpush1.msra.mxu0 0.0
  %955 = vmatprep.subr.mxu0 0.0
  %956 = vmatpush1.msra.mxu0 0.0
  %957 = vmatprep.subr.mxu0 0.0
  %958 = vmatpush1.msra.mxu0 0.0
  %959 = vmatprep.subr.mxu0 0.0
  %960 = vmatpush1.msra.mxu0 0.0
  %961 = vmatprep.subr.mxu0 0.0
  %962 = vmatpush1.msra.mxu0 0.0
  %963 = vmatprep.subr.mxu0 0.0
  %964 = vmatpush1.msra.mxu0 0.0
  %965 = vmatprep.subr.mxu0 0.0
  %966 = vmatpush1.msra.mxu0 0.0
  %967 = vmatprep.subr.mxu0 0.0
  %968 = vmatpush1.msra.mxu0 0.0
  %969 = vmatprep.subr.mxu0 0.0
  %970 = vmatpush1.msra.mxu0 0.0
  %971 = vmatprep.mubr.f32.mxu0 0.0
  %972 = vmatmul.mubr.f32.gmra.mrb[0].mxu0 %v825
  %v973 = vpop.f32.mrb[0].mxu0
  %v974 = vadd.f32 0.0, %v973
  %v975 = vpop.f32.mrb[0].mxu0
  %976 = vdwg.mxu0
  %s977 = scalar_lea.vmem %s5, 40
  %978 = vst.msk [vmem:[%s977] sm:$0xf] %vm182, %v974
  %s979 = scalar_lea.vmem %s5, 44
  %980 = vst.msk [vmem:[%s979] sm:$0xf] %vm182, %v974
  %s981 = scalar_lea.vmem %s0, 24
  %v982 = vld [vmem:[%s981] sm:$0xf]
  %v984 = vsel %vm22, %v982, 0
  %986 = vmatprep.subr.mxu0 0.0
  %987 = vmatpush1.msra.mxu0 %v28
  %988 = vmatprep.subr.mxu0 0.0
  %989 = vmatpush1.msra.mxu0 0.0
  %990 = vmatprep.subr.mxu0 0.0
  %991 = vmatpush1.msra.mxu0 0.0
  %992 = vmatprep.subr.mxu0 0.0
  %993 = vmatpush1.msra.mxu0 0.0
  %994 = vmatprep.subr.mxu0 0.0
  %995 = vmatpush1.msra.mxu0 0.0
  %996 = vmatprep.subr.mxu0 0.0
  %997 = vmatpush1.msra.mxu0 0.0
  %998 = vmatprep.subr.mxu0 0.0
  %999 = vmatpush1.msra.mxu0 0.0
  %1000 = vmatprep.subr.mxu0 0.0
  %1001 = vmatpush1.msra.mxu0 0.0
  %1002 = vmatprep.subr.mxu0 0.0
  %1003 = vmatpush1.msra.mxu0 0.0
  %1004 = vmatprep.subr.mxu0 0.0
  %1005 = vmatpush1.msra.mxu0 0.0
  %1006 = vmatprep.subr.mxu0 0.0
  %1007 = vmatpush1.msra.mxu0 0.0
  %1008 = vmatprep.subr.mxu0 0.0
  %1009 = vmatpush1.msra.mxu0 0.0
  %1010 = vmatprep.subr.mxu0 0.0
  %1011 = vmatpush1.msra.mxu0 0.0
  %1012 = vmatprep.subr.mxu0 0.0
  %1013 = vmatpush1.msra.mxu0 0.0
  %1014 = vmatprep.subr.mxu0 0.0
  %1015 = vmatpush1.msra.mxu0 0.0
  %1016 = vmatprep.subr.mxu0 0.0
  %1017 = vmatpush1.msra.mxu0 0.0
  %1018 = vmatprep.subr.mxu0 0.0
  %1019 = vmatpush1.msra.mxu0 0.0
  %1020 = vmatprep.subr.mxu0 0.0
  %1021 = vmatpush1.msra.mxu0 0.0
  %1022 = vmatprep.subr.mxu0 0.0
  %1023 = vmatpush1.msra.mxu0 0.0
  %1024 = vmatprep.subr.mxu0 0.0
  %1025 = vmatpush1.msra.mxu0 0.0
  %1026 = vmatprep.subr.mxu0 0.0
  %1027 = vmatpush1.msra.mxu0 0.0
  %1028 = vmatprep.subr.mxu0 0.0
  %1029 = vmatpush1.msra.mxu0 0.0
  %1030 = vmatprep.subr.mxu0 0.0
  %1031 = vmatpush1.msra.mxu0 0.0
  %1032 = vmatprep.subr.mxu0 0.0
  %1033 = vmatpush1.msra.mxu0 0.0
  %1034 = vmatprep.subr.mxu0 0.0
  %1035 = vmatpush1.msra.mxu0 0.0
  %1036 = vmatprep.subr.mxu0 0.0
  %1037 = vmatpush1.msra.mxu0 0.0
  %1038 = vmatprep.subr.mxu0 0.0
  %1039 = vmatpush1.msra.mxu0 0.0
  %1040 = vmatprep.subr.mxu0 0.0
  %1041 = vmatpush1.msra.mxu0 0.0
  %1042 = vmatprep.subr.mxu0 0.0
  %1043 = vmatpush1.msra.mxu0 0.0
  %1044 = vmatprep.subr.mxu0 0.0
  %1045 = vmatpush1.msra.mxu0 0.0
  %1046 = vmatprep.subr.mxu0 0.0
  %1047 = vmatpush1.msra.mxu0 0.0
  %1048 = vmatprep.subr.mxu0 0.0
  %1049 = vmatpush1.msra.mxu0 0.0
  %1050 = vmatprep.mubr.f32.mxu0 0.0
  %1051 = vmatmul.mubr.f32.gmra.mrb[0].mxu0 %v984
  %v1052 = vpop.f32.mrb[0].mxu0
  %v1053 = vadd.f32 0.0, %v1052
  %v1054 = vpop.f32.mrb[0].mxu0
  %1055 = vdwg.mxu0
  %s1056 = scalar_lea.vmem %s1, 48
  %v1057 = vld [vmem:[%s1056] sm:$0xf]
  %v1058 = vmul.f32 %v1057, %v1053
  %s1059 = scalar_lea.vmem %s4, 48
  %1060 = vst.msk [vmem:[%s1059] sm:$0xf] %vm102, %v1058
  %s1061 = scalar_lea.vmem %s1, 52
  %v1062 = vld [vmem:[%s1061] sm:$0xf]
  %v1063 = vmul.f32 %v1062, %v1053
  %s1064 = scalar_lea.vmem %s4, 52
  %1065 = vst.msk [vmem:[%s1064] sm:$0xf] %vm102, %v1063
  %1066 = vmatprep.subr.mxu0 0.0
  %1067 = vmatpush1.msra.mxu0 %v110
  %1068 = vmatprep.subr.mxu0 0.0
  %1069 = vmatpush1.msra.mxu0 0.0
  %1070 = vmatprep.subr.mxu0 0.0
  %1071 = vmatpush1.msra.mxu0 0.0
  %1072 = vmatprep.subr.mxu0 0.0
  %1073 = vmatpush1.msra.mxu0 0.0
  %1074 = vmatprep.subr.mxu0 0.0
  %1075 = vmatpush1.msra.mxu0 0.0
  %1076 = vmatprep.subr.mxu0 0.0
  %1077 = vmatpush1.msra.mxu0 0.0
  %1078 = vmatprep.subr.mxu0 0.0
  %1079 = vmatpush1.msra.mxu0 0.0
  %1080 = vmatprep.subr.mxu0 0.0
  %1081 = vmatpush1.msra.mxu0 0.0
  %1082 = vmatprep.subr.mxu0 0.0
  %1083 = vmatpush1.msra.mxu0 0.0
  %1084 = vmatprep.subr.mxu0 0.0
  %1085 = vmatpush1.msra.mxu0 0.0
  %1086 = vmatprep.subr.mxu0 0.0
  %1087 = vmatpush1.msra.mxu0 0.0
  %1088 = vmatprep.subr.mxu0 0.0
  %1089 = vmatpush1.msra.mxu0 0.0
  %1090 = vmatprep.subr.mxu0 0.0
  %1091 = vmatpush1.msra.mxu0 0.0
  %1092 = vmatprep.subr.mxu0 0.0
  %1093 = vmatpush1.msra.mxu0 0.0
  %1094 = vmatprep.subr.mxu0 0.0
  %1095 = vmatpush1.msra.mxu0 0.0
  %1096 = vmatprep.subr.mxu0 0.0
  %1097 = vmatpush1.msra.mxu0 0.0
  %1098 = vmatprep.subr.mxu0 0.0
  %1099 = vmatpush1.msra.mxu0 0.0
  %1100 = vmatprep.subr.mxu0 0.0
  %1101 = vmatpush1.msra.mxu0 0.0
  %1102 = vmatprep.subr.mxu0 0.0
  %1103 = vmatpush1.msra.mxu0 0.0
  %1104 = vmatprep.subr.mxu0 0.0
  %1105 = vmatpush1.msra.mxu0 0.0
  %1106 = vmatprep.subr.mxu0 0.0
  %1107 = vmatpush1.msra.mxu0 0.0
  %1108 = vmatprep.subr.mxu0 0.0
  %1109 = vmatpush1.msra.mxu0 0.0
  %1110 = vmatprep.subr.mxu0 0.0
  %1111 = vmatpush1.msra.mxu0 0.0
  %1112 = vmatprep.subr.mxu0 0.0
  %1113 = vmatpush1.msra.mxu0 0.0
  %1114 = vmatprep.subr.mxu0 0.0
  %1115 = vmatpush1.msra.mxu0 0.0
  %1116 = vmatprep.subr.mxu0 0.0
  %1117 = vmatpush1.msra.mxu0 0.0
  %1118 = vmatprep.subr.mxu0 0.0
  %1119 = vmatpush1.msra.mxu0 0.0
  %1120 = vmatprep.subr.mxu0 0.0
  %1121 = vmatpush1.msra.mxu0 0.0
  %1122 = vmatprep.subr.mxu0 0.0
  %1123 = vmatpush1.msra.mxu0 0.0
  %1124 = vmatprep.subr.mxu0 0.0
  %1125 = vmatpush1.msra.mxu0 0.0
  %1126 = vmatprep.subr.mxu0 0.0
  %1127 = vmatpush1.msra.mxu0 0.0
  %1128 = vmatprep.subr.mxu0 0.0
  %1129 = vmatpush1.msra.mxu0 0.0
  %1130 = vmatprep.mubr.f32.mxu0 0.0
  %1131 = vmatmul.mubr.f32.gmra.mrb[0].mxu0 %v984
  %v1132 = vpop.f32.mrb[0].mxu0
  %v1133 = vadd.f32 0.0, %v1132
  %v1134 = vpop.f32.mrb[0].mxu0
  %1135 = vdwg.mxu0
  %s1136 = scalar_lea.vmem %s5, 48
  %1137 = vst.msk [vmem:[%s1136] sm:$0xf] %vm182, %v1133
  %s1138 = scalar_lea.vmem %s5, 52
  %1139 = vst.msk [vmem:[%s1138] sm:$0xf] %vm182, %v1133
  %s1140 = scalar_lea.vmem %s0, 28
  %v1141 = vld [vmem:[%s1140] sm:$0xf]
  %v1143 = vsel %vm22, %v1141, 0
  %1145 = vmatprep.subr.mxu0 0.0
  %1146 = vmatpush1.msra.mxu0 %v28
  %1147 = vmatprep.subr.mxu0 0.0
  %1148 = vmatpush1.msra.mxu0 0.0
  %1149 = vmatprep.subr.mxu0 0.0
  %1150 = vmatpush1.msra.mxu0 0.0
  %1151 = vmatprep.subr.mxu0 0.0
  %1152 = vmatpush1.msra.mxu0 0.0
  %1153 = vmatprep.subr.mxu0 0.0
  %1154 = vmatpush1.msra.mxu0 0.0
  %1155 = vmatprep.subr.mxu0 0.0
  %1156 = vmatpush1.msra.mxu0 0.0
  %1157 = vmatprep.subr.mxu0 0.0
  %1158 = vmatpush1.msra.mxu0 0.0
  %1159 = vmatprep.subr.mxu0 0.0
  %1160 = vmatpush1.msra.mxu0 0.0
  %1161 = vmatprep.subr.mxu0 0.0
  %1162 = vmatpush1.msra.mxu0 0.0
  %1163 = vmatprep.subr.mxu0 0.0
  %1164 = vmatpush1.msra.mxu0 0.0
  %1165 = vmatprep.subr.mxu0 0.0
  %1166 = vmatpush1.msra.mxu0 0.0
  %1167 = vmatprep.subr.mxu0 0.0
  %1168 = vmatpush1.msra.mxu0 0.0
  %1169 = vmatprep.subr.mxu0 0.0
  %1170 = vmatpush1.msra.mxu0 0.0
  %1171 = vmatprep.subr.mxu0 0.0
  %1172 = vmatpush1.msra.mxu0 0.0
  %1173 = vmatprep.subr.mxu0 0.0
  %1174 = vmatpush1.msra.mxu0 0.0
  %1175 = vmatprep.subr.mxu0 0.0
  %1176 = vmatpush1.msra.mxu0 0.0
  %1177 = vmatprep.subr.mxu0 0.0
  %1178 = vmatpush1.msra.mxu0 0.0
  %1179 = vmatprep.subr.mxu0 0.0
  %1180 = vmatpush1.msra.mxu0 0.0
  %1181 = vmatprep.subr.mxu0 0.0
  %1182 = vmatpush1.msra.mxu0 0.0
  %1183 = vmatprep.subr.mxu0 0.0
  %1184 = vmatpush1.msra.mxu0 0.0
  %1185 = vmatprep.subr.mxu0 0.0
  %1186 = vmatpush1.msra.mxu0 0.0
  %1187 = vmatprep.subr.mxu0 0.0
  %1188 = vmatpush1.msra.mxu0 0.0
  %1189 = vmatprep.subr.mxu0 0.0
  %1190 = vmatpush1.msra.mxu0 0.0
  %1191 = vmatprep.subr.mxu0 0.0
  %1192 = vmatpush1.msra.mxu0 0.0
  %1193 = vmatprep.subr.mxu0 0.0
  %1194 = vmatpush1.msra.mxu0 0.0
  %1195 = vmatprep.subr.mxu0 0.0
  %1196 = vmatpush1.msra.mxu0 0.0
  %1197 = vmatprep.subr.mxu0 0.0
  %1198 = vmatpush1.msra.mxu0 0.0
  %1199 = vmatprep.subr.mxu0 0.0
  %1200 = vmatpush1.msra.mxu0 0.0
  %1201 = vmatprep.subr.mxu0 0.0
  %1202 = vmatpush1.msra.mxu0 0.0
  %1203 = vmatprep.subr.mxu0 0.0
  %1204 = vmatpush1.msra.mxu0 0.0
  %1205 = vmatprep.subr.mxu0 0.0
  %1206 = vmatpush1.msra.mxu0 0.0
  %1207 = vmatprep.subr.mxu0 0.0
  %1208 = vmatpush1.msra.mxu0 0.0
  %1209 = vmatprep.mubr.f32.mxu0 0.0
  %1210 = vmatmul.mubr.f32.gmra.mrb[0].mxu0 %v1143
  %v1211 = vpop.f32.mrb[0].mxu0
  %v1212 = vadd.f32 0.0, %v1211
  %v1213 = vpop.f32.mrb[0].mxu0
  %1214 = vdwg.mxu0
  %s1215 = scalar_lea.vmem %s1, 56
  %v1216 = vld [vmem:[%s1215] sm:$0xf]
  %v1217 = vmul.f32 %v1216, %v1212
  %s1218 = scalar_lea.vmem %s4, 56
  %1219 = vst.msk [vmem:[%s1218] sm:$0xf] %vm102, %v1217
  %s1220 = scalar_lea.vmem %s1, 60
  %v1221 = vld [vmem:[%s1220] sm:$0xf]
  %v1222 = vmul.f32 %v1221, %v1212
  %s1223 = scalar_lea.vmem %s4, 60
  %1224 = vst.msk [vmem:[%s1223] sm:$0xf] %vm102, %v1222
  %1225 = vmatprep.subr.mxu0 0.0
  %1226 = vmatpush1.msra.mxu0 %v110
  %1227 = vmatprep.subr.mxu0 0.0
  %1228 = vmatpush1.msra.mxu0 0.0
  %1229 = vmatprep.subr.mxu0 0.0
  %1230 = vmatpush1.msra.mxu0 0.0
  %1231 = vmatprep.subr.mxu0 0.0
  %1232 = vmatpush1.msra.mxu0 0.0
  %1233 = vmatprep.subr.mxu0 0.0
  %1234 = vmatpush1.msra.mxu0 0.0
  %1235 = vmatprep.subr.mxu0 0.0
  %1236 = vmatpush1.msra.mxu0 0.0
  %1237 = vmatprep.subr.mxu0 0.0
  %1238 = vmatpush1.msra.mxu0 0.0
  %1239 = vmatprep.subr.mxu0 0.0
  %1240 = vmatpush1.msra.mxu0 0.0
  %1241 = vmatprep.subr.mxu0 0.0
  %1242 = vmatpush1.msra.mxu0 0.0
  %1243 = vmatprep.subr.mxu0 0.0
  %1244 = vmatpush1.msra.mxu0 0.0
  %1245 = vmatprep.subr.mxu0 0.0
  %1246 = vmatpush1.msra.mxu0 0.0
  %1247 = vmatprep.subr.mxu0 0.0
  %1248 = vmatpush1.msra.mxu0 0.0
  %1249 = vmatprep.subr.mxu0 0.0
  %1250 = vmatpush1.msra.mxu0 0.0
  %1251 = vmatprep.subr.mxu0 0.0
  %1252 = vmatpush1.msra.mxu0 0.0
  %1253 = vmatprep.subr.mxu0 0.0
  %1254 = vmatpush1.msra.mxu0 0.0
  %1255 = vmatprep.subr.mxu0 0.0
  %1256 = vmatpush1.msra.mxu0 0.0
  %1257 = vmatprep.subr.mxu0 0.0
  %1258 = vmatpush1.msra.mxu0 0.0
  %1259 = vmatprep.subr.mxu0 0.0
  %1260 = vmatpush1.msra.mxu0 0.0
  %1261 = vmatprep.subr.mxu0 0.0
  %1262 = vmatpush1.msra.mxu0 0.0
  %1263 = vmatprep.subr.mxu0 0.0
  %1264 = vmatpush1.msra.mxu0 0.0
  %1265 = vmatprep.subr.mxu0 0.0
  %1266 = vmatpush1.msra.mxu0 0.0
  %1267 = vmatprep.subr.mxu0 0.0
  %1268 = vmatpush1.msra.mxu0 0.0
  %1269 = vmatprep.subr.mxu0 0.0
  %1270 = vmatpush1.msra.mxu0 0.0
  %1271 = vmatprep.subr.mxu0 0.0
  %1272 = vmatpush1.msra.mxu0 0.0
  %1273 = vmatprep.subr.mxu0 0.0
  %1274 = vmatpush1.msra.mxu0 0.0
  %1275 = vmatprep.subr.mxu0 0.0
  %1276 = vmatpush1.msra.mxu0 0.0
  %1277 = vmatprep.subr.mxu0 0.0
  %1278 = vmatpush1.msra.mxu0 0.0
  %1279 = vmatprep.subr.mxu0 0.0
  %1280 = vmatpush1.msra.mxu0 0.0
  %1281 = vmatprep.subr.mxu0 0.0
  %1282 = vmatpush1.msra.mxu0 0.0
  %1283 = vmatprep.subr.mxu0 0.0
  %1284 = vmatpush1.msra.mxu0 0.0
  %1285 = vmatprep.subr.mxu0 0.0
  %1286 = vmatpush1.msra.mxu0 0.0
  %1287 = vmatprep.subr.mxu0 0.0
  %1288 = vmatpush1.msra.mxu0 0.0
  %1289 = vmatprep.mubr.f32.mxu0 0.0
  %1290 = vmatmul.mubr.f32.gmra.mrb[0].mxu0 %v1143
  %v1291 = vpop.f32.mrb[0].mxu0
  %v1292 = vadd.f32 0.0, %v1291
  %v1293 = vpop.f32.mrb[0].mxu0
  %1294 = vdwg.mxu0
  %s1295 = scalar_lea.vmem %s5, 56
  %1296 = vst.msk [vmem:[%s1295] sm:$0xf] %vm182, %v1292
  %s1297 = scalar_lea.vmem %s5, 60
  %1298 = vst.msk [vmem:[%s1297] sm:$0xf] %vm182, %v1292
  // Predicated region
  $region18: #{attention_block_forward.3} parent=0 // pred_check
    _
  $region19: #{attention_block_forward.3} parent=0 // pred_check_branch
    %1300 = sbr.rel (0) target = $region21
  $region20: #{attention_block_forward.3} parent=0 // pred_region
    _
  $region21: #{attention_block_forward.3} parent=0 // pred_fallthru
    _
  // Predicated region
  $region22: #{attention_block_forward.3} parent=0 // pred_check
    _
  $region23: #{attention_block_forward.3} parent=0 // pred_check_branch
    %1302 = sbr.rel (0) target = $region25
  $region24: #{attention_block_forward.3} parent=0 // pred_region
    _
  $region25: #{attention_block_forward.3} parent=0 // pred_fallthru
    _
  // Predicated region
  $region26: #{attention_block_forward.3} parent=0 // pred_check
    _
  $region27: #{attention_block_forward.3} parent=0 // pred_check_branch
    %1304 = sbr.rel (0) target = $region29
  $region28: #{attention_block_forward.3} parent=0 // pred_region
    _
  $region29: #{attention_block_forward.3} parent=0 // pred_fallthru
    _
  // Predicated region
  $region30: #{attention_block_forward.3} parent=0 // pred_check
    _
  $region31: #{attention_block_forward.3} parent=0 // pred_check_branch
    %1306 = sbr.rel (0) target = $region33
  $region32: #{attention_block_forward.3} parent=0 // pred_region
    _
  $region33: #{attention_block_forward.3} parent=0 // pred_fallthru
    _

</llo_original>
